<compile_context>
chip_gen: v7x
topology: tpu7x:2x2x1
jax: 0.10.0
libtpu: 0.0.40
codegen_flags: <defaults>
</compile_context>

<pallas_src>
import math

import jax
import jax.numpy as jnp
from jax.experimental import pallas as pl
from jax.experimental.pallas import tpu as pltpu


def _dense_pe_kernel(g_ref, c_ref, o_ref):
    """Compute one (C, TP) tile of the dense positional encoding.

    g_ref : (C, 3)   per-channel [2*pi*Gx, 2*pi*Gy, phase]   (C = 2F)
    c_ref : (2, TP)  per-pixel   [cx; cy] in [-1, 1] for this tile of pixels
    o_ref : (C, TP)  output tile (channels on sublanes, pixels on lanes)
    """
    gx = g_ref[:, 0:1]      # (C, 1)
    gy = g_ref[:, 1:2]      # (C, 1)
    ph = g_ref[:, 2:3]      # (C, 1)
    cx = c_ref[0:1, :]      # (1, TP)
    cy = c_ref[1:2, :]      # (1, TP)
    # Full-lane-width angle + a single transcendental (cos == sin + pi/2);
    # store is unmasked / lane-dense since TP is a multiple of 128.
    o_ref[...] = jnp.sin(cx * gx + cy * gy + ph)


def _pick_tile_pixels(hw, cap=4096):
    """Largest multiple-of-128 pixel tile that divides H*W and is <= cap,
    preferring choices that leave >= 2 grid steps (v7x megacore sharding)."""
    if hw <= 128:
        return hw
    cands = [t for t in range(128, min(cap, hw) + 1, 128) if hw % t == 0]
    if not cands:
        return hw  # fallback: single full-width tile (block == full array dim)
    multi = [t for t in cands if hw // t >= 2]
    return max(multi) if multi else max(cands)


def dense_pe_pallas(gaussian_matrix, size):
    """Pallas version of PositionEmbeddingRandom.forward(size) -> (1, 2F, H, W)."""
    H, W = size
    g = gaussian_matrix.astype(jnp.float32)
    F = g.shape[1]
    C = 2 * F
    HW = H * W
    TP = _pick_tile_pixels(HW)
    n_steps = HW // TP

    two_pi = 2.0 * math.pi
    # Per-channel projection coefficients duplicated to the full C lanes, with
    # 2*pi folded in, plus the sin/cos phase offset.
    gx = two_pi * jnp.concatenate([g[0], g[0]])                            # (C,)
    gy = two_pi * jnp.concatenate([g[1], g[1]])                            # (C,)
    ph = jnp.concatenate([jnp.zeros((F,), jnp.float32),
                          jnp.full((F,), 0.5 * math.pi, jnp.float32)])     # (C,)
    g_prep = jnp.stack([gx, gy, ph], axis=1)                               # (C, 3)

    # Per-pixel normalized coordinates in [-1, 1], flattened row-major (tiny).
    ys = 2.0 * ((jnp.arange(H, dtype=jnp.float32) + 0.5) / H) - 1.0
    xs = 2.0 * ((jnp.arange(W, dtype=jnp.float32) + 0.5) / W) - 1.0
    grid_y, grid_x = jnp.meshgrid(ys, xs, indexing="ij")
    coords = jnp.stack([grid_x.reshape(-1), grid_y.reshape(-1)], axis=0)   # (2, HW)

    pe_chw = pl.pallas_call(
        _dense_pe_kernel,
        out_shape=jax.ShapeDtypeStruct((C, HW), jnp.float32),
        grid_spec=pltpu.PrefetchScalarGridSpec(
            num_scalar_prefetch=0,
            grid=(n_steps,),
            in_specs=[
                pl.BlockSpec((C, 3), lambda i: (0, 0)),    # coefficients (tiny)
                pl.BlockSpec((2, TP), lambda i: (0, i)),   # pixel-coord tile
            ],
            out_specs=pl.BlockSpec((C, TP), lambda i: (0, i)),
        ),
        compiler_params=pltpu.CompilerParams(
            dimension_semantics=("parallel",),
            vmem_limit_bytes=32 * 1024 * 1024,
        ),
    )(g_prep, coords)

    # (C, H*W) -> (1, C, H, W): contiguous reshape; no extra HBM pass.
    return pe_chw.reshape(1, C, H, W)


class LoadedDecoderPallas:
    """JAX/Pallas analogue of LoadedDecoder."""

    def __init__(self, num_pos_feats=64, scale=1.0, key=None):
        if key is None:
            key = jax.random.PRNGKey(0)
        # deterministic stand-in for PositionEmbeddingRandom's Gaussian buffer
        self.gaussian_matrix = scale * jax.random.normal(
            key, (2, num_pos_feats), dtype=jnp.float32)

    def forward(self, *args):
        # TODO(synk): `aoti_compiled_model` is an opaque pre-compiled artifact;
        # forward() is pure delegation with no compute defined in this module,
        # so it is passed through unchanged here.
        return args if len(args) != 1 else args[0]

    def get_dense_pe(self, size):
        return dense_pe_pallas(self.gaussian_matrix, size)


if __name__ == "__main__":
    key = jax.random.PRNGKey(0)
    k_g, k_x = jax.random.split(key)

    decoder = LoadedDecoderPallas(num_pos_feats=64, scale=1.0, key=k_g)

    # forward() pass-through example input (NCHW, as the PyTorch server uses)
    x = jax.random.normal(k_x, (2, 4, 16, 16), dtype=jnp.float32)
    y = decoder.forward(x)
    assert y.shape == (2, 4, 16, 16)

    # get_dense_pe: the Pallas kernel hot path
    pe = decoder.get_dense_pe((16, 16))
    pe = jax.block_until_ready(pe)
    assert pe.shape == (1, 128, 16, 16)

    # sanity check against a pure-JAX reference of PositionEmbeddingRandom
    H, W = 16, 16
    yy = (jnp.arange(H, dtype=jnp.float32) + 0.5) / H
    xx = (jnp.arange(W, dtype=jnp.float32) + 0.5) / W
    grid_y, grid_x = jnp.meshgrid(yy, xx, indexing="ij")
    ref_coords = jnp.stack([grid_x, grid_y], axis=-1)       # (H, W, 2)
    ref_coords = 2.0 * ref_coords - 1.0
    proj = 2.0 * math.pi * (ref_coords @ decoder.gaussian_matrix)
    ref = jnp.concatenate([jnp.sin(proj), jnp.cos(proj)], axis=-1)
    ref = jnp.transpose(ref, (2, 0, 1))[None]
    err = float(jnp.abs(pe - ref).max())
    assert err < 1e-4, err

    print("KERNEL_OK")
</pallas_src>

<mosaic_0001>
module attributes {stable_mosaic.version = 11 : i64} {
  func.func @_dense_pe_kernel(%arg0: i32, %arg1: memref<128x3xf32, #tpu.memory_space<vmem>>, %arg2: memref<2x128xf32, #tpu.memory_space<vmem>>, %arg3: memref<128x128xf32, #tpu.memory_space<vmem>>) attributes {dimension_semantics = [#tpu.dimension_semantics<parallel>], iteration_bounds = array<i64: 2>, scalar_prefetch = 0 : i64, scratch_operands = 0 : i64, tpu.core_type = #tpu.core_type<tc>, window_params = [{pipeline_mode = #tpu.pipeline_mode<synchronous>, transform_indices = @transform_0, window_bounds = array<i64: 128, 3>}, {transform_indices = @transform_1, window_bounds = array<i64: 2, 128>}, {transform_indices = @transform_2, window_bounds = array<i64: 128, 128>}]} {
    %c0 = arith.constant 0 : index
    %c0_0 = arith.constant 0 : index
    %0 = vector.load %arg1[%c0, %c0_0] : memref<128x3xf32, #tpu.memory_space<vmem>>, vector<128x1xf32>
    %c0_1 = arith.constant 0 : index
    %c1 = arith.constant 1 : index
    %1 = vector.load %arg1[%c0_1, %c1] : memref<128x3xf32, #tpu.memory_space<vmem>>, vector<128x1xf32>
    %c0_2 = arith.constant 0 : index
    %c2 = arith.constant 2 : index
    %2 = vector.load %arg1[%c0_2, %c2] : memref<128x3xf32, #tpu.memory_space<vmem>>, vector<128x1xf32>
    %c0_3 = arith.constant 0 : index
    %c0_4 = arith.constant 0 : index
    %3 = vector.load %arg2[%c0_3, %c0_4] : memref<2x128xf32, #tpu.memory_space<vmem>>, vector<1x128xf32>
    %c1_5 = arith.constant 1 : index
    %c0_6 = arith.constant 0 : index
    %4 = vector.load %arg2[%c1_5, %c0_6] : memref<2x128xf32, #tpu.memory_space<vmem>>, vector<1x128xf32>
    %5 = vector.broadcast %3 : vector<1x128xf32> to vector<128x128xf32>
    %6 = vector.broadcast %0 : vector<128x1xf32> to vector<128x128xf32>
    %7 = arith.mulf %5, %6 : vector<128x128xf32>
    %8 = vector.broadcast %4 : vector<1x128xf32> to vector<128x128xf32>
    %9 = vector.broadcast %1 : vector<128x1xf32> to vector<128x128xf32>
    %10 = arith.mulf %8, %9 : vector<128x128xf32>
    %11 = arith.addf %7, %10 : vector<128x128xf32>
    %12 = vector.broadcast %2 : vector<128x1xf32> to vector<128x128xf32>
    %13 = arith.addf %11, %12 : vector<128x128xf32>
    %14 = math.sin %13 : vector<128x128xf32>
    %c0_7 = arith.constant 0 : index
    %c0_8 = arith.constant 0 : index
    %15 = vector.load %arg3[%c0_7, %c0_8] : memref<128x128xf32, #tpu.memory_space<vmem>>, vector<128x128xf32>
    tpu.vector_store %arg3[%c0_7, %c0_8], %14 {strides = array<i32>} : memref<128x128xf32, #tpu.memory_space<vmem>>, vector<128x128xf32>,
    return
  }
  func.func @transform_0(%arg0: i32) -> (i32, i32) {
    %c0_i32 = arith.constant 0 : i32
    %c0_i32_0 = arith.constant 0 : i32
    %c0_i32_1 = arith.constant 0 : i32
    return %c0_i32, %c0_i32_0 : i32, i32
  }
  func.func @transform_1(%arg0: i32) -> (i32, i32) {
    %c0_i32 = arith.constant 0 : i32
    %c0_i32_0 = arith.constant 0 : i32
    return %c0_i32, %arg0 : i32, i32
  }
  func.func @transform_2(%arg0: i32) -> (i32, i32) {
    %c0_i32 = arith.constant 0 : i32
    %c0_i32_0 = arith.constant 0 : i32
    return %c0_i32, %arg0 : i32, i32
  }
}

</mosaic_0001>

<llo_original>
// kernel: tpu_custom_call.1
$region0: #{tpu_custom_call.1}
  #allocation0 [shape = 'u32[]', space=smem, size = 0x4, offset = 0x4, fixed_abs, tag = 'smem constant byte address 0x4 - core index']
  #allocation1 [shape = 'u32[144,128]{1,0:T(1,128)}', space=vmem, size = 0x12000, scoped, tag = 'internal scratch']
  %s0 = inlined_call_operand.vmem [shape: f32[128,3], index: 0, kind: input, shape index: {}]
  %s1 = inlined_call_operand.vmem [shape: f32[2,256], index: 1, kind: input, shape index: {}]
  %s2 = inlined_call_operand.hbm [shape: f32[128,256], index: 2, kind: output, shape index: {}]
  %s3 = sld [smem:[#allocation0]]
  $region41: #{tpu_custom_call.1} parent=0
    _
  %s5 = ssub.s32 1, %s3
  %s6 = scalar_select 0, %s5, %s3
  $region1: #{tpu_custom_call.1} parent=0
    #allocation2 [shape = 'u8[131072]{0}', space=vmem, size = 0x20000, scoped, tag = 'output window, operand 0']
    #allocation3 [shape = 's32[2]{0}', space=sflag, size = 0x8, scoped, tag = 'scoped memory for tpu_custom_call.1']
    %7 = vsyncpa [#allocation3], 0
    %s8 = scalar_lea.sflag [#allocation3], 1
    %9 = vsyncpa %s8, 0
    loop: start=0, step=1, limit=4
    $region2: #{tpu_custom_call.1} parent=1 // loop_pre_header
      _
    $region3: #{tpu_custom_call.1} parent=1 // loop_header
      %s11 = sphi 0, %s15
      %p12 = scmp.ge.s32.totalorder %s11, 4
      %s19 = sphi 0, %s19
      %s21 = sphi 0, %s19
      %s22 = sphi 0, %s21
      %s36 = sphi 0, %s22
      %s42 = sphi 0, %s44
      %s45 = sphi 0, %s42
      %s46 = sphi 0, %s45
      %s62 = sphi 0, %s46
      %s68 = sphi 0, %s70
      %s71 = sphi 0, %s68
      %s72 = sphi 0, %s71
      %s88 = sphi 0, %s72
    $region4: #{tpu_custom_call.1} parent=1 // loop_header_branch
      %14 = sbr.rel (%p12) target = $region8
    $region5: #{tpu_custom_call.1} parent=1 // loop_body
      %s16 = ssub.s32 %s11, 1
      %s17 = ssub.s32 %s11, 2
      %s18 = sadd.s32 %s11, 1
      %s20 = sadd.s32 %s19, 1
      %p23 = scmp.eq.s32.totalorder %s11, 1
      %p24 = scmp.ne.s32.totalorder %s19, %s21
      %p25 = scmp.eq.s32.totalorder %s11, 0
      %p26 = por %p24, %p25
      %p27 = scmp.ne.s32.totalorder %s19, %s21
      %p28 = scmp.eq.s32.totalorder %s16, 1
      %p29 = por %p27, %p28
      %p30 = scmp.ne.s32.totalorder %s21, %s22
      %p31 = scmp.eq.s32.totalorder %s16, 0
      %p32 = por %p30, %p31
      %p33 = scmp.ne.s32.totalorder %s21, %s22
      %p34 = scmp.eq.s32.totalorder %s17, 1
      %p35 = por %p33, %p34
      %p37 = scmp.ne.s32.totalorder %s22, %s36
      %p38 = scmp.eq.s32.totalorder %s17, 0
      %p39 = por %p37, %p38
      %s40 = ssub.s32 %s11, %s18
      %p41 = scmp.eq.s32.totalorder %s40, 0
      %s43 = sadd.s32 %s42, 1
      %s44 = scalar_select %p41, %s42, %s43
      %p47 = pneg %p41
      %p48 = scmp.eq.s32.totalorder %s11, 1
      %p49 = por %p47, %p48
      %p50 = scmp.ne.s32.totalorder %s42, %s45
      %p51 = scmp.eq.s32.totalorder %s11, 0
      %p52 = por %p50, %p51
      %p53 = scmp.ne.s32.totalorder %s42, %s45
      %p54 = scmp.eq.s32.totalorder %s16, 1
      %p55 = por %p53, %p54
      %p56 = scmp.ne.s32.totalorder %s45, %s46
      %p57 = scmp.eq.s32.totalorder %s16, 0
      %p58 = por %p56, %p57
      %p59 = scmp.ne.s32.totalorder %s45, %s46
      %p60 = scmp.eq.s32.totalorder %s17, 1
      %p61 = por %p59, %p60
      %p63 = scmp.ne.s32.totalorder %s46, %s62
      %p64 = scmp.eq.s32.totalorder %s17, 0
      %p65 = por %p63, %p64
      %s66 = ssub.s32 %s11, %s18
      %p67 = scmp.eq.s32.totalorder %s66, 0
      %s69 = sadd.s32 %s68, 1
      %s70 = scalar_select %p67, %s68, %s69
      %p73 = pneg %p67
      %p74 = scmp.eq.s32.totalorder %s11, 1
      %p75 = por %p73, %p74
      %p76 = scmp.ne.s32.totalorder %s68, %s71
      %p77 = scmp.eq.s32.totalorder %s11, 0
      %p78 = por %p76, %p77
      %p79 = scmp.ne.s32.totalorder %s68, %s71
      %p80 = scmp.eq.s32.totalorder %s16, 1
      %p81 = por %p79, %p80
      %p82 = scmp.ne.s32.totalorder %s71, %s72
      %p83 = scmp.eq.s32.totalorder %s16, 0
      %p84 = por %p82, %p83
      %p85 = scmp.ne.s32.totalorder %s71, %s72
      %p86 = scmp.eq.s32.totalorder %s17, 1
      %p87 = por %p85, %p86
      %p89 = scmp.ne.s32.totalorder %s72, %s88
      %p90 = scmp.eq.s32.totalorder %s17, 0
      %p91 = por %p89, %p90
      %p92 = scmp.le.s32.totalorder 1, %s11
      %p93 = scmp.lt.s32.totalorder %s11, 3
      %p94 = pnand %p92, %p93
      %p95 = pneg %p94
      // Predicated region
      $region9: #{tpu_custom_call.1} parent=5 // pred_check
        _
      $region10: #{tpu_custom_call.1} parent=5 // pred_check_branch
        %97 = sbr.rel (%p94) target = $region12
      $region11: #{tpu_custom_call.1} parent=5 // pred_region
        %s98 = ssub.s32 %s11, 1
        // Predicated region
        $region13: #{tpu_custom_call.1} parent=11 // pred_check
          %p99 = pneg %p32
        $region14: #{tpu_custom_call.1} parent=11 // pred_check_branch
          %101 = sbr.rel (%p99) target = $region16
        $region15: #{tpu_custom_call.1} parent=11 // pred_region
          _
        $region16: #{tpu_custom_call.1} parent=11 // pred_fallthru
          _
      $region12: #{tpu_custom_call.1} parent=5 // pred_fallthru
        _
      %p102 = scmp.lt.s32.totalorder %s11, 2
      // Predicated region
      $region17: #{tpu_custom_call.1} parent=5 // pred_check
        %p103 = pneg %p102
      $region18: #{tpu_custom_call.1} parent=5 // pred_check_branch
        %105 = sbr.rel (%p103) target = $region20
      $region19: #{tpu_custom_call.1} parent=5 // pred_region
        // Predicated region
        $region21: #{tpu_custom_call.1} parent=19 // pred_check
          %p106 = pneg %p52
        $region22: #{tpu_custom_call.1} parent=19 // pred_check_branch
          %108 = sbr.rel (%p106) target = $region24
        $region23: #{tpu_custom_call.1} parent=19 // pred_region
          %p109 = scmp.lt.s32.totalorder %s11, 1
          %s110 = scalar_select %p109, %s11, 1
          %s111 = smul.addr %s110, 2
          %s112 = scalar_lea.vmem %s1, %s111
        $region24: #{tpu_custom_call.1} parent=19 // pred_fallthru
          _
      $region20: #{tpu_custom_call.1} parent=5 // pred_fallthru
        _
      %p113 = scmp.le.s32.totalorder 1, %s11
      %p114 = scmp.lt.s32.totalorder %s11, 3
      %p115 = pnand %p113, %p114
      %p116 = pneg %p115
      // Predicated region
      $region25: #{tpu_custom_call.1} parent=5 // pred_check
        _
      $region26: #{tpu_custom_call.1} parent=5 // pred_check_branch
        %118 = sbr.rel (%p115) target = $region28
      $region27: #{tpu_custom_call.1} parent=5 // pred_region
        %s119 = ssub.s32 %s11, 1
        %p120 = pneg %p32
        %p121 = pneg %p29
        %p122 = scmp.lt.s32.totalorder %s16, 1
        %s123 = scalar_select %p122, %s16, 1
        %s124 = smul.addr %s123, 2
        %s125 = scalar_lea.vmem %s1, %s124
        %p126 = pneg %p58
        %p127 = pneg %p55
        %p128 = pneg %p84
        %p129 = pneg %p81
        %s130 = sand.u32 %s71, 1
        %s131 = scalar_lea.sflag [#allocation3], %s130
        %s132 = sand.u32 %s71, 1
        %s133 = smul.addr %s132, 128
        %s134 = scalar_lea.vmem [#allocation2], %s133
        %p135 = scmp.lt.s32.totalorder %s16, 1
        %s136 = scalar_select %p135, %s16, 1
        %s137 = smul.addr %s136, 2
        %s138 = scalar_lea.vmem %s1, %s137
        %v139 = vld [vmem:[%s0] sm:$0xff]
        %v140 = vld [vmem:[%s0 + $0x8] sm:$0xff]
        %v141 = vld [vmem:[%s0 + $0x10] sm:$0xff]
        %v142 = vld [vmem:[%s0 + $0x18] sm:$0xff]
        %v143 = vld [vmem:[%s0 + $0x20] sm:$0xff]
        %v144 = vld [vmem:[%s0 + $0x28] sm:$0xff]
        %v145 = vld [vmem:[%s0 + $0x30] sm:$0xff]
        %v146 = vld [vmem:[%s0 + $0x38] sm:$0xff]
        %v147 = vld [vmem:[%s0 + $0x40] sm:$0xff]
        %v148 = vld [vmem:[%s0 + $0x48] sm:$0xff]
        %v149 = vld [vmem:[%s0 + $0x50] sm:$0xff]
        %v150 = vld [vmem:[%s0 + $0x58] sm:$0xff]
        %v151 = vld [vmem:[%s0 + $0x60] sm:$0xff]
        %v152 = vld [vmem:[%s0 + $0x68] sm:$0xff]
        %v153 = vld [vmem:[%s0 + $0x70] sm:$0xff]
        %v154 = vld [vmem:[%s0 + $0x78] sm:$0xff]
        %v155 = vld [vmem:[%s138] sm:$0x1]
        %v156 = vld [vmem:[%s138 + $0x1] sm:$0x1]
        %v157 = vlaneseq
        %v158 = vshrl.u32 %v157, 7
        %v159 = vsub.s32 0, %v158
        %v160 = vrot.slane %v155, %v159
        %162 = vset.pattern.permute.xlu0 0
        %163 = vperm.xlu0 %162, %v139
        %v164 = vpop.permute.xlu0 %163
        %167 = vset.pattern.permute.xlu0 0
        %168 = vperm.xlu0 %167, %v140
        %v169 = vpop.permute.xlu0 %168
        %172 = vset.pattern.permute.xlu0 0
        %173 = vperm.xlu0 %172, %v141
        %v174 = vpop.permute.xlu0 %173
        %177 = vset.pattern.permute.xlu0 0
        %178 = vperm.xlu0 %177, %v142
        %v179 = vpop.permute.xlu0 %178
        %182 = vset.pattern.permute.xlu0 0
        %183 = vperm.xlu0 %182, %v143
        %v184 = vpop.permute.xlu0 %183
        %187 = vset.pattern.permute.xlu0 0
        %188 = vperm.xlu0 %187, %v144
        %v189 = vpop.permute.xlu0 %188
        %192 = vset.pattern.permute.xlu0 0
        %193 = vperm.xlu0 %192, %v145
        %v194 = vpop.permute.xlu0 %193
        %197 = vset.pattern.permute.xlu0 0
        %198 = vperm.xlu0 %197, %v146
        %v199 = vpop.permute.xlu0 %198
        %202 = vset.pattern.permute.xlu0 0
        %203 = vperm.xlu0 %202, %v147
        %v204 = vpop.permute.xlu0 %203
        %207 = vset.pattern.permute.xlu0 0
        %208 = vperm.xlu0 %207, %v148
        %v209 = vpop.permute.xlu0 %208
        %212 = vset.pattern.permute.xlu0 0
        %213 = vperm.xlu0 %212, %v149
        %v214 = vpop.permute.xlu0 %213
        %217 = vset.pattern.permute.xlu0 0
        %218 = vperm.xlu0 %217, %v150
        %v219 = vpop.permute.xlu0 %218
        %222 = vset.pattern.permute.xlu0 0
        %223 = vperm.xlu0 %222, %v151
        %v224 = vpop.permute.xlu0 %223
        %227 = vset.pattern.permute.xlu0 0
        %228 = vperm.xlu0 %227, %v152
        %v229 = vpop.permute.xlu0 %228
        %232 = vset.pattern.permute.xlu0 0
        %233 = vperm.xlu0 %232, %v153
        %v234 = vpop.permute.xlu0 %233
        %237 = vset.pattern.permute.xlu0 0
        %238 = vperm.xlu0 %237, %v154
        %v239 = vpop.permute.xlu0 %238
        %v241 = vmul.f32 %v160, %v164
        %v242 = vmul.f32 %v160, %v169
        %v243 = vmul.f32 %v160, %v174
        %v244 = vmul.f32 %v160, %v179
        %v245 = vmul.f32 %v160, %v184
        %v246 = vmul.f32 %v160, %v189
        %v247 = vmul.f32 %v160, %v194
        %v248 = vmul.f32 %v160, %v199
        %v249 = vmul.f32 %v160, %v204
        %v250 = vmul.f32 %v160, %v209
        %v251 = vmul.f32 %v160, %v214
        %v252 = vmul.f32 %v160, %v219
        %v253 = vmul.f32 %v160, %v224
        %v254 = vmul.f32 %v160, %v229
        %v255 = vmul.f32 %v160, %v234
        %v256 = vmul.f32 %v160, %v239
        %v257 = vlaneseq
        %v258 = vshrl.u32 %v257, 7
        %v259 = vsub.s32 0, %v258
        %v260 = vrot.slane %v156, %v259
        %261 = vset.pattern.permute.xlu0 1
        %262 = vperm.xlu0 %261, %v139
        %v263 = vpop.permute.xlu0 %262
        %265 = vset.pattern.permute.xlu0 1
        %266 = vperm.xlu0 %265, %v140
        %v267 = vpop.permute.xlu0 %266
        %269 = vset.pattern.permute.xlu0 1
        %270 = vperm.xlu0 %269, %v141
        %v271 = vpop.permute.xlu0 %270
        %273 = vset.pattern.permute.xlu0 1
        %274 = vperm.xlu0 %273, %v142
        %v275 = vpop.permute.xlu0 %274
        %277 = vset.pattern.permute.xlu0 1
        %278 = vperm.xlu0 %277, %v143
        %v279 = vpop.permute.xlu0 %278
        %281 = vset.pattern.permute.xlu0 1
        %282 = vperm.xlu0 %281, %v144
        %v283 = vpop.permute.xlu0 %282
        %285 = vset.pattern.permute.xlu0 1
        %286 = vperm.xlu0 %285, %v145
        %v287 = vpop.permute.xlu0 %286
        %289 = vset.pattern.permute.xlu0 1
        %290 = vperm.xlu0 %289, %v146
        %v291 = vpop.permute.xlu0 %290
        %293 = vset.pattern.permute.xlu0 1
        %294 = vperm.xlu0 %293, %v147
        %v295 = vpop.permute.xlu0 %294
        %297 = vset.pattern.permute.xlu0 1
        %298 = vperm.xlu0 %297, %v148
        %v299 = vpop.permute.xlu0 %298
        %301 = vset.pattern.permute.xlu0 1
        %302 = vperm.xlu0 %301, %v149
        %v303 = vpop.permute.xlu0 %302
        %305 = vset.pattern.permute.xlu0 1
        %306 = vperm.xlu0 %305, %v150
        %v307 = vpop.permute.xlu0 %306
        %309 = vset.pattern.permute.xlu0 1
        %310 = vperm.xlu0 %309, %v151
        %v311 = vpop.permute.xlu0 %310
        %313 = vset.pattern.permute.xlu0 1
        %314 = vperm.xlu0 %313, %v152
        %v315 = vpop.permute.xlu0 %314
        %317 = vset.pattern.permute.xlu0 1
        %318 = vperm.xlu0 %317, %v153
        %v319 = vpop.permute.xlu0 %318
        %321 = vset.pattern.permute.xlu0 1
        %322 = vperm.xlu0 %321, %v154
        %v323 = vpop.permute.xlu0 %322
        %v325 = vmul.f32 %v260, %v263
        %v326 = vmul.f32 %v260, %v267
        %v327 = vmul.f32 %v260, %v271
        %v328 = vmul.f32 %v260, %v275
        %v329 = vmul.f32 %v260, %v279
        %v330 = vmul.f32 %v260, %v283
        %v331 = vmul.f32 %v260, %v287
        %v332 = vmul.f32 %v260, %v291
        %v333 = vmul.f32 %v260, %v295
        %v334 = vmul.f32 %v260, %v299
        %v335 = vmul.f32 %v260, %v303
        %v336 = vmul.f32 %v260, %v307
        %v337 = vmul.f32 %v260, %v311
        %v338 = vmul.f32 %v260, %v315
        %v339 = vmul.f32 %v260, %v319
        %v340 = vmul.f32 %v260, %v323
        %v341 = vadd.f32 %v241, %v325
        %v342 = vadd.f32 %v242, %v326
        %v343 = vadd.f32 %v243, %v327
        %v344 = vadd.f32 %v244, %v328
        %v345 = vadd.f32 %v245, %v329
        %v346 = vadd.f32 %v246, %v330
        %v347 = vadd.f32 %v247, %v331
        %v348 = vadd.f32 %v248, %v332
        %v349 = vadd.f32 %v249, %v333
        %v350 = vadd.f32 %v250, %v334
        %v351 = vadd.f32 %v251, %v335
        %v352 = vadd.f32 %v252, %v336
        %v353 = vadd.f32 %v253, %v337
        %v354 = vadd.f32 %v254, %v338
        %v355 = vadd.f32 %v255, %v339
        %v356 = vadd.f32 %v256, %v340
        %357 = vset.pattern.permute.xlu0 2
        %358 = vperm.xlu0 %357, %v139
        %v359 = vpop.permute.xlu0 %358
        %361 = vset.pattern.permute.xlu0 2
        %362 = vperm.xlu0 %361, %v140
        %v363 = vpop.permute.xlu0 %362
        %365 = vset.pattern.permute.xlu0 2
        %366 = vperm.xlu0 %365, %v141
        %v367 = vpop.permute.xlu0 %366
        %369 = vset.pattern.permute.xlu0 2
        %370 = vperm.xlu0 %369, %v142
        %v371 = vpop.permute.xlu0 %370
        %373 = vset.pattern.permute.xlu0 2
        %374 = vperm.xlu0 %373, %v143
        %v375 = vpop.permute.xlu0 %374
        %377 = vset.pattern.permute.xlu0 2
        %378 = vperm.xlu0 %377, %v144
        %v379 = vpop.permute.xlu0 %378
        %381 = vset.pattern.permute.xlu0 2
        %382 = vperm.xlu0 %381, %v145
        %v383 = vpop.permute.xlu0 %382
        %385 = vset.pattern.permute.xlu0 2
        %386 = vperm.xlu0 %385, %v146
        %v387 = vpop.permute.xlu0 %386
        %389 = vset.pattern.permute.xlu0 2
        %390 = vperm.xlu0 %389, %v147
        %v391 = vpop.permute.xlu0 %390
        %393 = vset.pattern.permute.xlu0 2
        %394 = vperm.xlu0 %393, %v148
        %v395 = vpop.permute.xlu0 %394
        %397 = vset.pattern.permute.xlu0 2
        %398 = vperm.xlu0 %397, %v149
        %v399 = vpop.permute.xlu0 %398
        %401 = vset.pattern.permute.xlu0 2
        %402 = vperm.xlu0 %401, %v150
        %v403 = vpop.permute.xlu0 %402
        %405 = vset.pattern.permute.xlu0 2
        %406 = vperm.xlu0 %405, %v151
        %v407 = vpop.permute.xlu0 %406
        %409 = vset.pattern.permute.xlu0 2
        %410 = vperm.xlu0 %409, %v152
        %v411 = vpop.permute.xlu0 %410
        %413 = vset.pattern.permute.xlu0 2
        %414 = vperm.xlu0 %413, %v153
        %v415 = vpop.permute.xlu0 %414
        %417 = vset.pattern.permute.xlu0 2
        %418 = vperm.xlu0 %417, %v154
        %v419 = vpop.permute.xlu0 %418
        %v421 = vadd.f32 %v341, %v359
        %v422 = vadd.f32 %v342, %v363
        %v423 = vadd.f32 %v343, %v367
        %v424 = vadd.f32 %v344, %v371
        %v425 = vadd.f32 %v345, %v375
        %v426 = vadd.f32 %v346, %v379
        %v427 = vadd.f32 %v347, %v383
        %v428 = vadd.f32 %v348, %v387
        %v429 = vadd.f32 %v349, %v391
        %v430 = vadd.f32 %v350, %v395
        %v431 = vadd.f32 %v351, %v399
        %v432 = vadd.f32 %v352, %v403
        %v433 = vadd.f32 %v353, %v407
        %v434 = vadd.f32 %v354, %v411
        %v435 = vadd.f32 %v355, %v415
        %v436 = vadd.f32 %v356, %v419
        %v437 = vand.u32 2147483647, %v421
        %vm438 = vcmp.le.f32.partialorder %v437, 0.7853982
        %vm439 = vcmp.lt.s32.totalorder %v421, 0
        %v440 = vand.u32 %v421, 2139095040
        %v441 = vshrl.u32 %v440, 23
        %v442 = vsub.s32 %v441, 127
        %v443 = vand.u32 2147483647, %v421
        %v444 = vand.u32 %v443, 8388607
        %v445 = vor.u32 %v444, 8388608
        %v446 = vsub.s32 0, %v445
        %v447 = vadd.s32 %v442, 1
        %vm448 = vcmp.gt.s32.totalorder %v447, 0
        %v449 = vsel %vm448, %v447, 0
        %v450 = vshrl.u32 %v449, 5
        %v451 = vand.u32 %v449, 31
        %v452 = vsub.s32 32, %v451
        %v453 = vshrl.u32 683565275, %v452
        %v454 = vshll.u32 683565275, %v451
        %v455 = vshrl.u32 2475754826, %v452
        %v456 = vor.u32 %v454, %v455
        %v457 = vshll.u32 2475754826, %v451
        %v458 = vshrl.u32 2131351028, %v452
        %v459 = vor.u32 %v457, %v458
        %v460 = vshll.u32 2131351028, %v451
        %v461 = vshrl.u32 2102212464, %v452
        %v462 = vor.u32 %v460, %v461
        %v463 = vshll.u32 2102212464, %v451
        %v464 = vshrl.u32 920167782, %v452
        %v465 = vor.u32 %v463, %v464
        %v466 = vshll.u32 920167782, %v451
        %v467 = vshrl.u32 1326507024, %v452
        %v468 = vor.u32 %v466, %v467
        %vm469 = vcmp.lt.s32.totalorder %v450, 1
        %vm470 = vcmp.lt.s32.totalorder %v450, 2
        %vm471 = vcmp.lt.s32.totalorder %v450, 3
        %vm472 = vcmp.lt.s32.totalorder %v450, 4
        %v473 = vsel %vm469, %v453, %v456
        %v474 = vsel %vm472, %v462, 2102212464
        %v475 = vsel %vm471, %v459, %v474
        %v476 = vsel %vm470, %v473, %v475
        %v477 = vsel %vm469, %v456, %v459
        %v478 = vsel %vm472, %v465, 920167782
        %v479 = vsel %vm471, %v462, %v478
        %v480 = vsel %vm470, %v477, %v479
        %v481 = vsel %vm469, %v459, %v462
        %v482 = vsel %vm472, %v468, 1326507024
        %v483 = vsel %vm471, %v465, %v482
        %v484 = vsel %vm470, %v481, %v483
        %v485 = vshll.u32 %v445, 8
        %v486 = vmul.u32.u64.compose %v485, %v484
        %v487 = vextract.low.u32 %v486
        %v488 = vextract.high.u32 %v486
        %v489 = vmul.u32.u64.compose %v485, %v480
        %v490 = vextract.low.u32 %v489
        %v491 = vextract.high.u32 %v489
        %v492 = vmul.u32 %v485, %v476
        %v493 = vadd.s32 %v488, %v490
        %vm494 = vc.u32 %v488, %v490
        %v495 = vadd.s32 %v491, 1
        %v496 = vsel %vm494, %v495, %v491
        %v497 = vadd.s32 %v492, %v496
        %v498 = vadd.s32 %v497, 536870912
        %v499 = vshrl.u32 %v498, 30
        %v500 = vshll.u32 %v499, 30
        %v501 = vsub.s32 %v497, %v500
        %vm502 = vcmp.lt.s32.totalorder %v501, 0
        %v503 = vsub.s32 0, %v501
        %v504 = vsel %vm502, %v503, %v501
        %v505 = vclz %v504
        %v506 = vsub.s32 %v505, 2
        %vm507 = vcmp.gt.s32.totalorder 0, %v506
        %v508 = vsel %vm507, 0, %v506
        %v509 = vsub.s32 32, %v508
        %v510 = vshll.u32 %v501, %v508
        %v511 = vshrl.u32 %v493, %v509
        %v512 = vor.u32 %v510, %v511
        %v513 = vsub.s32 4294967266, %v508
        %v514 = vadd.s32 %v513, 127
        %v515 = vshll.u32 %v514, 23
        %v516 = vor.u32 4788187, %v515
        %v517 = vand.u32 2147483647, %v516
        %v519 = vcvt.s32.f32 %v512
        %v520 = vmul.f32 %v519, %v517
        %v521 = vxor.u32 %v520, 2147483648
        %v522 = vsel %vm439, %v521, %v520
        %v523 = vsub.s32 4, %v499
        %v524 = vsel %vm439, %v523, %v499
        %v525 = vsel %vm438, %v421, %v522
        %v526 = vsel %vm438, 0, %v524
        %v527 = vcosq.f32.pop %v525
        %v528 = vsinq.f32.pop %v525
        %vm529 = vweird.f32 %v421
        %v530 = vadd.s32 %v526, 3
        %v531 = vand.u32 %v530, 3
        %vm532 = vcmp.lt.s32.totalorder %v531, 2
        %vm533 = vcmp.eq.s32.totalorder %v531, 0
        %v534 = vxor.u32 %v528, 2147483648
        %v535 = vsel %vm533, %v527, %v534
        %vm536 = vcmp.eq.s32.totalorder %v531, 2
        %v537 = vxor.u32 %v527, 2147483648
        %v538 = vsel %vm536, %v537, %v528
        %v539 = vsel %vm532, %v535, %v538
        %v540 = vsel %vm529, nan, %v539
        %v541 = vand.u32 2147483647, %v422
        %vm542 = vcmp.le.f32.partialorder %v541, 0.7853982
        %vm543 = vcmp.lt.s32.totalorder %v422, 0
        %v544 = vand.u32 %v422, 2139095040
        %v545 = vshrl.u32 %v544, 23
        %v546 = vsub.s32 %v545, 127
        %v547 = vand.u32 2147483647, %v422
        %v548 = vand.u32 %v547, 8388607
        %v549 = vor.u32 %v548, 8388608
        %v550 = vsub.s32 0, %v549
        %v551 = vadd.s32 %v546, 1
        %vm552 = vcmp.gt.s32.totalorder %v551, 0
        %v553 = vsel %vm552, %v551, 0
        %v554 = vshrl.u32 %v553, 5
        %v555 = vand.u32 %v553, 31
        %v556 = vsub.s32 32, %v555
        %v557 = vshrl.u32 683565275, %v556
        %v558 = vshll.u32 683565275, %v555
        %v559 = vshrl.u32 2475754826, %v556
        %v560 = vor.u32 %v558, %v559
        %v561 = vshll.u32 2475754826, %v555
        %v562 = vshrl.u32 2131351028, %v556
        %v563 = vor.u32 %v561, %v562
        %v564 = vshll.u32 2131351028, %v555
        %v565 = vshrl.u32 2102212464, %v556
        %v566 = vor.u32 %v564, %v565
        %v567 = vshll.u32 2102212464, %v555
        %v568 = vshrl.u32 920167782, %v556
        %v569 = vor.u32 %v567, %v568
        %v570 = vshll.u32 920167782, %v555
        %v571 = vshrl.u32 1326507024, %v556
        %v572 = vor.u32 %v570, %v571
        %vm573 = vcmp.lt.s32.totalorder %v554, 1
        %vm574 = vcmp.lt.s32.totalorder %v554, 2
        %vm575 = vcmp.lt.s32.totalorder %v554, 3
        %vm576 = vcmp.lt.s32.totalorder %v554, 4
        %v577 = vsel %vm573, %v557, %v560
        %v578 = vsel %vm576, %v566, 2102212464
        %v579 = vsel %vm575, %v563, %v578
        %v580 = vsel %vm574, %v577, %v579
        %v581 = vsel %vm573, %v560, %v563
        %v582 = vsel %vm576, %v569, 920167782
        %v583 = vsel %vm575, %v566, %v582
        %v584 = vsel %vm574, %v581, %v583
        %v585 = vsel %vm573, %v563, %v566
        %v586 = vsel %vm576, %v572, 1326507024
        %v587 = vsel %vm575, %v569, %v586
        %v588 = vsel %vm574, %v585, %v587
        %v589 = vshll.u32 %v549, 8
        %v590 = vmul.u32.u64.compose %v589, %v588
        %v591 = vextract.low.u32 %v590
        %v592 = vextract.high.u32 %v590
        %v593 = vmul.u32.u64.compose %v589, %v584
        %v594 = vextract.low.u32 %v593
        %v595 = vextract.high.u32 %v593
        %v596 = vmul.u32 %v589, %v580
        %v597 = vadd.s32 %v592, %v594
        %vm598 = vc.u32 %v592, %v594
        %v599 = vadd.s32 %v595, 1
        %v600 = vsel %vm598, %v599, %v595
        %v601 = vadd.s32 %v596, %v600
        %v602 = vadd.s32 %v601, 536870912
        %v603 = vshrl.u32 %v602, 30
        %v604 = vshll.u32 %v603, 30
        %v605 = vsub.s32 %v601, %v604
        %vm606 = vcmp.lt.s32.totalorder %v605, 0
        %v607 = vsub.s32 0, %v605
        %v608 = vsel %vm606, %v607, %v605
        %v609 = vclz %v608
        %v610 = vsub.s32 %v609, 2
        %vm611 = vcmp.gt.s32.totalorder 0, %v610
        %v612 = vsel %vm611, 0, %v610
        %v613 = vsub.s32 32, %v612
        %v614 = vshll.u32 %v605, %v612
        %v615 = vshrl.u32 %v597, %v613
        %v616 = vor.u32 %v614, %v615
        %v617 = vsub.s32 4294967266, %v612
        %v618 = vadd.s32 %v617, 127
        %v619 = vshll.u32 %v618, 23
        %v620 = vor.u32 4788187, %v619
        %v621 = vand.u32 2147483647, %v620
        %v623 = vcvt.s32.f32 %v616
        %v624 = vmul.f32 %v623, %v621
        %v625 = vxor.u32 %v624, 2147483648
        %v626 = vsel %vm543, %v625, %v624
        %v627 = vsub.s32 4, %v603
        %v628 = vsel %vm543, %v627, %v603
        %v629 = vsel %vm542, %v422, %v626
        %v630 = vsel %vm542, 0, %v628
        %v631 = vcosq.f32.pop %v629
        %v632 = vsinq.f32.pop %v629
        %vm633 = vweird.f32 %v422
        %v634 = vadd.s32 %v630, 3
        %v635 = vand.u32 %v634, 3
        %vm636 = vcmp.lt.s32.totalorder %v635, 2
        %vm637 = vcmp.eq.s32.totalorder %v635, 0
        %v638 = vxor.u32 %v632, 2147483648
        %v639 = vsel %vm637, %v631, %v638
        %vm640 = vcmp.eq.s32.totalorder %v635, 2
        %v641 = vxor.u32 %v631, 2147483648
        %v642 = vsel %vm640, %v641, %v632
        %v643 = vsel %vm636, %v639, %v642
        %v644 = vsel %vm633, nan, %v643
        %v645 = vand.u32 2147483647, %v423
        %vm646 = vcmp.le.f32.partialorder %v645, 0.7853982
        %vm647 = vcmp.lt.s32.totalorder %v423, 0
        %v648 = vand.u32 %v423, 2139095040
        %v649 = vshrl.u32 %v648, 23
        %v650 = vsub.s32 %v649, 127
        %v651 = vand.u32 2147483647, %v423
        %v652 = vand.u32 %v651, 8388607
        %v653 = vor.u32 %v652, 8388608
        %v654 = vsub.s32 0, %v653
        %v655 = vadd.s32 %v650, 1
        %vm656 = vcmp.gt.s32.totalorder %v655, 0
        %v657 = vsel %vm656, %v655, 0
        %v658 = vshrl.u32 %v657, 5
        %v659 = vand.u32 %v657, 31
        %v660 = vsub.s32 32, %v659
        %v661 = vshrl.u32 683565275, %v660
        %v662 = vshll.u32 683565275, %v659
        %v663 = vshrl.u32 2475754826, %v660
        %v664 = vor.u32 %v662, %v663
        %v665 = vshll.u32 2475754826, %v659
        %v666 = vshrl.u32 2131351028, %v660
        %v667 = vor.u32 %v665, %v666
        %v668 = vshll.u32 2131351028, %v659
        %v669 = vshrl.u32 2102212464, %v660
        %v670 = vor.u32 %v668, %v669
        %v671 = vshll.u32 2102212464, %v659
        %v672 = vshrl.u32 920167782, %v660
        %v673 = vor.u32 %v671, %v672
        %v674 = vshll.u32 920167782, %v659
        %v675 = vshrl.u32 1326507024, %v660
        %v676 = vor.u32 %v674, %v675
        %vm677 = vcmp.lt.s32.totalorder %v658, 1
        %vm678 = vcmp.lt.s32.totalorder %v658, 2
        %vm679 = vcmp.lt.s32.totalorder %v658, 3
        %vm680 = vcmp.lt.s32.totalorder %v658, 4
        %v681 = vsel %vm677, %v661, %v664
        %v682 = vsel %vm680, %v670, 2102212464
        %v683 = vsel %vm679, %v667, %v682
        %v684 = vsel %vm678, %v681, %v683
        %v685 = vsel %vm677, %v664, %v667
        %v686 = vsel %vm680, %v673, 920167782
        %v687 = vsel %vm679, %v670, %v686
        %v688 = vsel %vm678, %v685, %v687
        %v689 = vsel %vm677, %v667, %v670
        %v690 = vsel %vm680, %v676, 1326507024
        %v691 = vsel %vm679, %v673, %v690
        %v692 = vsel %vm678, %v689, %v691
        %v693 = vshll.u32 %v653, 8
        %v694 = vmul.u32.u64.compose %v693, %v692
        %v695 = vextract.low.u32 %v694
        %v696 = vextract.high.u32 %v694
        %v697 = vmul.u32.u64.compose %v693, %v688
        %v698 = vextract.low.u32 %v697
        %v699 = vextract.high.u32 %v697
        %v700 = vmul.u32 %v693, %v684
        %v701 = vadd.s32 %v696, %v698
        %vm702 = vc.u32 %v696, %v698
        %v703 = vadd.s32 %v699, 1
        %v704 = vsel %vm702, %v703, %v699
        %v705 = vadd.s32 %v700, %v704
        %v706 = vadd.s32 %v705, 536870912
        %v707 = vshrl.u32 %v706, 30
        %v708 = vshll.u32 %v707, 30
        %v709 = vsub.s32 %v705, %v708
        %vm710 = vcmp.lt.s32.totalorder %v709, 0
        %v711 = vsub.s32 0, %v709
        %v712 = vsel %vm710, %v711, %v709
        %v713 = vclz %v712
        %v714 = vsub.s32 %v713, 2
        %vm715 = vcmp.gt.s32.totalorder 0, %v714
        %v716 = vsel %vm715, 0, %v714
        %v717 = vsub.s32 32, %v716
        %v718 = vshll.u32 %v709, %v716
        %v719 = vshrl.u32 %v701, %v717
        %v720 = vor.u32 %v718, %v719
        %v721 = vsub.s32 4294967266, %v716
        %v722 = vadd.s32 %v721, 127
        %v723 = vshll.u32 %v722, 23
        %v724 = vor.u32 4788187, %v723
        %v725 = vand.u32 2147483647, %v724
        %v727 = vcvt.s32.f32 %v720
        %v728 = vmul.f32 %v727, %v725
        %v729 = vxor.u32 %v728, 2147483648
        %v730 = vsel %vm647, %v729, %v728
        %v731 = vsub.s32 4, %v707
        %v732 = vsel %vm647, %v731, %v707
        %v733 = vsel %vm646, %v423, %v730
        %v734 = vsel %vm646, 0, %v732
        %v735 = vcosq.f32.pop %v733
        %v736 = vsinq.f32.pop %v733
        %vm737 = vweird.f32 %v423
        %v738 = vadd.s32 %v734, 3
        %v739 = vand.u32 %v738, 3
        %vm740 = vcmp.lt.s32.totalorder %v739, 2
        %vm741 = vcmp.eq.s32.totalorder %v739, 0
        %v742 = vxor.u32 %v736, 2147483648
        %v743 = vsel %vm741, %v735, %v742
        %vm744 = vcmp.eq.s32.totalorder %v739, 2
        %v745 = vxor.u32 %v735, 2147483648
        %v746 = vsel %vm744, %v745, %v736
        %v747 = vsel %vm740, %v743, %v746
        %v748 = vsel %vm737, nan, %v747
        %v749 = vand.u32 2147483647, %v424
        %vm750 = vcmp.le.f32.partialorder %v749, 0.7853982
        %vm751 = vcmp.lt.s32.totalorder %v424, 0
        %v752 = vand.u32 %v424, 2139095040
        %v753 = vshrl.u32 %v752, 23
        %v754 = vsub.s32 %v753, 127
        %v755 = vand.u32 2147483647, %v424
        %v756 = vand.u32 %v755, 8388607
        %v757 = vor.u32 %v756, 8388608
        %v758 = vsub.s32 0, %v757
        %v759 = vadd.s32 %v754, 1
        %vm760 = vcmp.gt.s32.totalorder %v759, 0
        %v761 = vsel %vm760, %v759, 0
        %v762 = vshrl.u32 %v761, 5
        %v763 = vand.u32 %v761, 31
        %v764 = vsub.s32 32, %v763
        %v765 = vshrl.u32 683565275, %v764
        %v766 = vshll.u32 683565275, %v763
        %v767 = vshrl.u32 2475754826, %v764
        %v768 = vor.u32 %v766, %v767
        %v769 = vshll.u32 2475754826, %v763
        %v770 = vshrl.u32 2131351028, %v764
        %v771 = vor.u32 %v769, %v770
        %v772 = vshll.u32 2131351028, %v763
        %v773 = vshrl.u32 2102212464, %v764
        %v774 = vor.u32 %v772, %v773
        %v775 = vshll.u32 2102212464, %v763
        %v776 = vshrl.u32 920167782, %v764
        %v777 = vor.u32 %v775, %v776
        %v778 = vshll.u32 920167782, %v763
        %v779 = vshrl.u32 1326507024, %v764
        %v780 = vor.u32 %v778, %v779
        %vm781 = vcmp.lt.s32.totalorder %v762, 1
        %vm782 = vcmp.lt.s32.totalorder %v762, 2
        %vm783 = vcmp.lt.s32.totalorder %v762, 3
        %vm784 = vcmp.lt.s32.totalorder %v762, 4
        %v785 = vsel %vm781, %v765, %v768
        %v786 = vsel %vm784, %v774, 2102212464
        %v787 = vsel %vm783, %v771, %v786
        %v788 = vsel %vm782, %v785, %v787
        %v789 = vsel %vm781, %v768, %v771
        %v790 = vsel %vm784, %v777, 920167782
        %v791 = vsel %vm783, %v774, %v790
        %v792 = vsel %vm782, %v789, %v791
        %v793 = vsel %vm781, %v771, %v774
        %v794 = vsel %vm784, %v780, 1326507024
        %v795 = vsel %vm783, %v777, %v794
        %v796 = vsel %vm782, %v793, %v795
        %v797 = vshll.u32 %v757, 8
        %v798 = vmul.u32.u64.compose %v797, %v796
        %v799 = vextract.low.u32 %v798
        %v800 = vextract.high.u32 %v798
        %v801 = vmul.u32.u64.compose %v797, %v792
        %v802 = vextract.low.u32 %v801
        %v803 = vextract.high.u32 %v801
        %v804 = vmul.u32 %v797, %v788
        %v805 = vadd.s32 %v800, %v802
        %vm806 = vc.u32 %v800, %v802
        %v807 = vadd.s32 %v803, 1
        %v808 = vsel %vm806, %v807, %v803
        %v809 = vadd.s32 %v804, %v808
        %v810 = vadd.s32 %v809, 536870912
        %v811 = vshrl.u32 %v810, 30
        %v812 = vshll.u32 %v811, 30
        %v813 = vsub.s32 %v809, %v812
        %vm814 = vcmp.lt.s32.totalorder %v813, 0
        %v815 = vsub.s32 0, %v813
        %v816 = vsel %vm814, %v815, %v813
        %v817 = vclz %v816
        %v818 = vsub.s32 %v817, 2
        %vm819 = vcmp.gt.s32.totalorder 0, %v818
        %v820 = vsel %vm819, 0, %v818
        %v821 = vsub.s32 32, %v820
        %v822 = vshll.u32 %v813, %v820
        %v823 = vshrl.u32 %v805, %v821
        %v824 = vor.u32 %v822, %v823
        %v825 = vsub.s32 4294967266, %v820
        %v826 = vadd.s32 %v825, 127
        %v827 = vshll.u32 %v826, 23
        %v828 = vor.u32 4788187, %v827
        %v829 = vand.u32 2147483647, %v828
        %v831 = vcvt.s32.f32 %v824
        %v832 = vmul.f32 %v831, %v829
        %v833 = vxor.u32 %v832, 2147483648
        %v834 = vsel %vm751, %v833, %v832
        %v835 = vsub.s32 4, %v811
        %v836 = vsel %vm751, %v835, %v811
        %v837 = vsel %vm750, %v424, %v834
        %v838 = vsel %vm750, 0, %v836
        %v839 = vcosq.f32.pop %v837
        %v840 = vsinq.f32.pop %v837
        %vm841 = vweird.f32 %v424
        %v842 = vadd.s32 %v838, 3
        %v843 = vand.u32 %v842, 3
        %vm844 = vcmp.lt.s32.totalorder %v843, 2
        %vm845 = vcmp.eq.s32.totalorder %v843, 0
        %v846 = vxor.u32 %v840, 2147483648
        %v847 = vsel %vm845, %v839, %v846
        %vm848 = vcmp.eq.s32.totalorder %v843, 2
        %v849 = vxor.u32 %v839, 2147483648
        %v850 = vsel %vm848, %v849, %v840
        %v851 = vsel %vm844, %v847, %v850
        %v852 = vsel %vm841, nan, %v851
        %v853 = vand.u32 2147483647, %v425
        %vm854 = vcmp.le.f32.partialorder %v853, 0.7853982
        %vm855 = vcmp.lt.s32.totalorder %v425, 0
        %v856 = vand.u32 %v425, 2139095040
        %v857 = vshrl.u32 %v856, 23
        %v858 = vsub.s32 %v857, 127
        %v859 = vand.u32 2147483647, %v425
        %v860 = vand.u32 %v859, 8388607
        %v861 = vor.u32 %v860, 8388608
        %v862 = vsub.s32 0, %v861
        %v863 = vadd.s32 %v858, 1
        %vm864 = vcmp.gt.s32.totalorder %v863, 0
        %v865 = vsel %vm864, %v863, 0
        %v866 = vshrl.u32 %v865, 5
        %v867 = vand.u32 %v865, 31
        %v868 = vsub.s32 32, %v867
        %v869 = vshrl.u32 683565275, %v868
        %v870 = vshll.u32 683565275, %v867
        %v871 = vshrl.u32 2475754826, %v868
        %v872 = vor.u32 %v870, %v871
        %v873 = vshll.u32 2475754826, %v867
        %v874 = vshrl.u32 2131351028, %v868
        %v875 = vor.u32 %v873, %v874
        %v876 = vshll.u32 2131351028, %v867
        %v877 = vshrl.u32 2102212464, %v868
        %v878 = vor.u32 %v876, %v877
        %v879 = vshll.u32 2102212464, %v867
        %v880 = vshrl.u32 920167782, %v868
        %v881 = vor.u32 %v879, %v880
        %v882 = vshll.u32 920167782, %v867
        %v883 = vshrl.u32 1326507024, %v868
        %v884 = vor.u32 %v882, %v883
        %vm885 = vcmp.lt.s32.totalorder %v866, 1
        %vm886 = vcmp.lt.s32.totalorder %v866, 2
        %vm887 = vcmp.lt.s32.totalorder %v866, 3
        %vm888 = vcmp.lt.s32.totalorder %v866, 4
        %v889 = vsel %vm885, %v869, %v872
        %v890 = vsel %vm888, %v878, 2102212464
        %v891 = vsel %vm887, %v875, %v890
        %v892 = vsel %vm886, %v889, %v891
        %v893 = vsel %vm885, %v872, %v875
        %v894 = vsel %vm888, %v881, 920167782
        %v895 = vsel %vm887, %v878, %v894
        %v896 = vsel %vm886, %v893, %v895
        %v897 = vsel %vm885, %v875, %v878
        %v898 = vsel %vm888, %v884, 1326507024
        %v899 = vsel %vm887, %v881, %v898
        %v900 = vsel %vm886, %v897, %v899
        %v901 = vshll.u32 %v861, 8
        %v902 = vmul.u32.u64.compose %v901, %v900
        %v903 = vextract.low.u32 %v902
        %v904 = vextract.high.u32 %v902
        %v905 = vmul.u32.u64.compose %v901, %v896
        %v906 = vextract.low.u32 %v905
        %v907 = vextract.high.u32 %v905
        %v908 = vmul.u32 %v901, %v892
        %v909 = vadd.s32 %v904, %v906
        %vm910 = vc.u32 %v904, %v906
        %v911 = vadd.s32 %v907, 1
        %v912 = vsel %vm910, %v911, %v907
        %v913 = vadd.s32 %v908, %v912
        %v914 = vadd.s32 %v913, 536870912
        %v915 = vshrl.u32 %v914, 30
        %v916 = vshll.u32 %v915, 30
        %v917 = vsub.s32 %v913, %v916
        %vm918 = vcmp.lt.s32.totalorder %v917, 0
        %v919 = vsub.s32 0, %v917
        %v920 = vsel %vm918, %v919, %v917
        %v921 = vclz %v920
        %v922 = vsub.s32 %v921, 2
        %vm923 = vcmp.gt.s32.totalorder 0, %v922
        %v924 = vsel %vm923, 0, %v922
        %v925 = vsub.s32 32, %v924
        %v926 = vshll.u32 %v917, %v924
        %v927 = vshrl.u32 %v909, %v925
        %v928 = vor.u32 %v926, %v927
        %v929 = vsub.s32 4294967266, %v924
        %v930 = vadd.s32 %v929, 127
        %v931 = vshll.u32 %v930, 23
        %v932 = vor.u32 4788187, %v931
        %v933 = vand.u32 2147483647, %v932
        %v935 = vcvt.s32.f32 %v928
        %v936 = vmul.f32 %v935, %v933
        %v937 = vxor.u32 %v936, 2147483648
        %v938 = vsel %vm855, %v937, %v936
        %v939 = vsub.s32 4, %v915
        %v940 = vsel %vm855, %v939, %v915
        %v941 = vsel %vm854, %v425, %v938
        %v942 = vsel %vm854, 0, %v940
        %v943 = vcosq.f32.pop %v941
        %v944 = vsinq.f32.pop %v941
        %vm945 = vweird.f32 %v425
        %v946 = vadd.s32 %v942, 3
        %v947 = vand.u32 %v946, 3
        %vm948 = vcmp.lt.s32.totalorder %v947, 2
        %vm949 = vcmp.eq.s32.totalorder %v947, 0
        %v950 = vxor.u32 %v944, 2147483648
        %v951 = vsel %vm949, %v943, %v950
        %vm952 = vcmp.eq.s32.totalorder %v947, 2
        %v953 = vxor.u32 %v943, 2147483648
        %v954 = vsel %vm952, %v953, %v944
        %v955 = vsel %vm948, %v951, %v954
        %v956 = vsel %vm945, nan, %v955
        %v957 = vand.u32 2147483647, %v426
        %vm958 = vcmp.le.f32.partialorder %v957, 0.7853982
        %vm959 = vcmp.lt.s32.totalorder %v426, 0
        %v960 = vand.u32 %v426, 2139095040
        %v961 = vshrl.u32 %v960, 23
        %v962 = vsub.s32 %v961, 127
        %v963 = vand.u32 2147483647, %v426
        %v964 = vand.u32 %v963, 8388607
        %v965 = vor.u32 %v964, 8388608
        %v966 = vsub.s32 0, %v965
        %v967 = vadd.s32 %v962, 1
        %vm968 = vcmp.gt.s32.totalorder %v967, 0
        %v969 = vsel %vm968, %v967, 0
        %v970 = vshrl.u32 %v969, 5
        %v971 = vand.u32 %v969, 31
        %v972 = vsub.s32 32, %v971
        %v973 = vshrl.u32 683565275, %v972
        %v974 = vshll.u32 683565275, %v971
        %v975 = vshrl.u32 2475754826, %v972
        %v976 = vor.u32 %v974, %v975
        %v977 = vshll.u32 2475754826, %v971
        %v978 = vshrl.u32 2131351028, %v972
        %v979 = vor.u32 %v977, %v978
        %v980 = vshll.u32 2131351028, %v971
        %v981 = vshrl.u32 2102212464, %v972
        %v982 = vor.u32 %v980, %v981
        %v983 = vshll.u32 2102212464, %v971
        %v984 = vshrl.u32 920167782, %v972
        %v985 = vor.u32 %v983, %v984
        %v986 = vshll.u32 920167782, %v971
        %v987 = vshrl.u32 1326507024, %v972
        %v988 = vor.u32 %v986, %v987
        %vm989 = vcmp.lt.s32.totalorder %v970, 1
        %vm990 = vcmp.lt.s32.totalorder %v970, 2
        %vm991 = vcmp.lt.s32.totalorder %v970, 3
        %vm992 = vcmp.lt.s32.totalorder %v970, 4
        %v993 = vsel %vm989, %v973, %v976
        %v994 = vsel %vm992, %v982, 2102212464
        %v995 = vsel %vm991, %v979, %v994
        %v996 = vsel %vm990, %v993, %v995
        %v997 = vsel %vm989, %v976, %v979
        %v998 = vsel %vm992, %v985, 920167782
        %v999 = vsel %vm991, %v982, %v998
        %v1000 = vsel %vm990, %v997, %v999
        %v1001 = vsel %vm989, %v979, %v982
        %v1002 = vsel %vm992, %v988, 1326507024
        %v1003 = vsel %vm991, %v985, %v1002
        %v1004 = vsel %vm990, %v1001, %v1003
        %v1005 = vshll.u32 %v965, 8
        %v1006 = vmul.u32.u64.compose %v1005, %v1004
        %v1007 = vextract.low.u32 %v1006
        %v1008 = vextract.high.u32 %v1006
        %v1009 = vmul.u32.u64.compose %v1005, %v1000
        %v1010 = vextract.low.u32 %v1009
        %v1011 = vextract.high.u32 %v1009
        %v1012 = vmul.u32 %v1005, %v996
        %v1013 = vadd.s32 %v1008, %v1010
        %vm1014 = vc.u32 %v1008, %v1010
        %v1015 = vadd.s32 %v1011, 1
        %v1016 = vsel %vm1014, %v1015, %v1011
        %v1017 = vadd.s32 %v1012, %v1016
        %v1018 = vadd.s32 %v1017, 536870912
        %v1019 = vshrl.u32 %v1018, 30
        %v1020 = vshll.u32 %v1019, 30
        %v1021 = vsub.s32 %v1017, %v1020
        %vm1022 = vcmp.lt.s32.totalorder %v1021, 0
        %v1023 = vsub.s32 0, %v1021
        %v1024 = vsel %vm1022, %v1023, %v1021
        %v1025 = vclz %v1024
        %v1026 = vsub.s32 %v1025, 2
        %vm1027 = vcmp.gt.s32.totalorder 0, %v1026
        %v1028 = vsel %vm1027, 0, %v1026
        %v1029 = vsub.s32 32, %v1028
        %v1030 = vshll.u32 %v1021, %v1028
        %v1031 = vshrl.u32 %v1013, %v1029
        %v1032 = vor.u32 %v1030, %v1031
        %v1033 = vsub.s32 4294967266, %v1028
        %v1034 = vadd.s32 %v1033, 127
        %v1035 = vshll.u32 %v1034, 23
        %v1036 = vor.u32 4788187, %v1035
        %v1037 = vand.u32 2147483647, %v1036
        %v1039 = vcvt.s32.f32 %v1032
        %v1040 = vmul.f32 %v1039, %v1037
        %v1041 = vxor.u32 %v1040, 2147483648
        %v1042 = vsel %vm959, %v1041, %v1040
        %v1043 = vsub.s32 4, %v1019
        %v1044 = vsel %vm959, %v1043, %v1019
        %v1045 = vsel %vm958, %v426, %v1042
        %v1046 = vsel %vm958, 0, %v1044
        %v1047 = vcosq.f32.pop %v1045
        %v1048 = vsinq.f32.pop %v1045
        %vm1049 = vweird.f32 %v426
        %v1050 = vadd.s32 %v1046, 3
        %v1051 = vand.u32 %v1050, 3
        %vm1052 = vcmp.lt.s32.totalorder %v1051, 2
        %vm1053 = vcmp.eq.s32.totalorder %v1051, 0
        %v1054 = vxor.u32 %v1048, 2147483648
        %v1055 = vsel %vm1053, %v1047, %v1054
        %vm1056 = vcmp.eq.s32.totalorder %v1051, 2
        %v1057 = vxor.u32 %v1047, 2147483648
        %v1058 = vsel %vm1056, %v1057, %v1048
        %v1059 = vsel %vm1052, %v1055, %v1058
        %v1060 = vsel %vm1049, nan, %v1059
        %v1061 = vand.u32 2147483647, %v427
        %vm1062 = vcmp.le.f32.partialorder %v1061, 0.7853982
        %vm1063 = vcmp.lt.s32.totalorder %v427, 0
        %v1064 = vand.u32 %v427, 2139095040
        %v1065 = vshrl.u32 %v1064, 23
        %v1066 = vsub.s32 %v1065, 127
        %v1067 = vand.u32 2147483647, %v427
        %v1068 = vand.u32 %v1067, 8388607
        %v1069 = vor.u32 %v1068, 8388608
        %v1070 = vsub.s32 0, %v1069
        %v1071 = vadd.s32 %v1066, 1
        %vm1072 = vcmp.gt.s32.totalorder %v1071, 0
        %v1073 = vsel %vm1072, %v1071, 0
        %v1074 = vshrl.u32 %v1073, 5
        %v1075 = vand.u32 %v1073, 31
        %v1076 = vsub.s32 32, %v1075
        %v1077 = vshrl.u32 683565275, %v1076
        %v1078 = vshll.u32 683565275, %v1075
        %v1079 = vshrl.u32 2475754826, %v1076
        %v1080 = vor.u32 %v1078, %v1079
        %v1081 = vshll.u32 2475754826, %v1075
        %v1082 = vshrl.u32 2131351028, %v1076
        %v1083 = vor.u32 %v1081, %v1082
        %v1084 = vshll.u32 2131351028, %v1075
        %v1085 = vshrl.u32 2102212464, %v1076
        %v1086 = vor.u32 %v1084, %v1085
        %v1087 = vshll.u32 2102212464, %v1075
        %v1088 = vshrl.u32 920167782, %v1076
        %v1089 = vor.u32 %v1087, %v1088
        %v1090 = vshll.u32 920167782, %v1075
        %v1091 = vshrl.u32 1326507024, %v1076
        %v1092 = vor.u32 %v1090, %v1091
        %vm1093 = vcmp.lt.s32.totalorder %v1074, 1
        %vm1094 = vcmp.lt.s32.totalorder %v1074, 2
        %vm1095 = vcmp.lt.s32.totalorder %v1074, 3
        %vm1096 = vcmp.lt.s32.totalorder %v1074, 4
        %v1097 = vsel %vm1093, %v1077, %v1080
        %v1098 = vsel %vm1096, %v1086, 2102212464
        %v1099 = vsel %vm1095, %v1083, %v1098
        %v1100 = vsel %vm1094, %v1097, %v1099
        %v1101 = vsel %vm1093, %v1080, %v1083
        %v1102 = vsel %vm1096, %v1089, 920167782
        %v1103 = vsel %vm1095, %v1086, %v1102
        %v1104 = vsel %vm1094, %v1101, %v1103
        %v1105 = vsel %vm1093, %v1083, %v1086
        %v1106 = vsel %vm1096, %v1092, 1326507024
        %v1107 = vsel %vm1095, %v1089, %v1106
        %v1108 = vsel %vm1094, %v1105, %v1107
        %v1109 = vshll.u32 %v1069, 8
        %v1110 = vmul.u32.u64.compose %v1109, %v1108
        %v1111 = vextract.low.u32 %v1110
        %v1112 = vextract.high.u32 %v1110
        %v1113 = vmul.u32.u64.compose %v1109, %v1104
        %v1114 = vextract.low.u32 %v1113
        %v1115 = vextract.high.u32 %v1113
        %v1116 = vmul.u32 %v1109, %v1100
        %v1117 = vadd.s32 %v1112, %v1114
        %vm1118 = vc.u32 %v1112, %v1114
        %v1119 = vadd.s32 %v1115, 1
        %v1120 = vsel %vm1118, %v1119, %v1115
        %v1121 = vadd.s32 %v1116, %v1120
        %v1122 = vadd.s32 %v1121, 536870912
        %v1123 = vshrl.u32 %v1122, 30
        %v1124 = vshll.u32 %v1123, 30
        %v1125 = vsub.s32 %v1121, %v1124
        %vm1126 = vcmp.lt.s32.totalorder %v1125, 0
        %v1127 = vsub.s32 0, %v1125
        %v1128 = vsel %vm1126, %v1127, %v1125
        %v1129 = vclz %v1128
        %v1130 = vsub.s32 %v1129, 2
        %vm1131 = vcmp.gt.s32.totalorder 0, %v1130
        %v1132 = vsel %vm1131, 0, %v1130
        %v1133 = vsub.s32 32, %v1132
        %v1134 = vshll.u32 %v1125, %v1132
        %v1135 = vshrl.u32 %v1117, %v1133
        %v1136 = vor.u32 %v1134, %v1135
        %v1137 = vsub.s32 4294967266, %v1132
        %v1138 = vadd.s32 %v1137, 127
        %v1139 = vshll.u32 %v1138, 23
        %v1140 = vor.u32 4788187, %v1139
        %v1141 = vand.u32 2147483647, %v1140
        %v1143 = vcvt.s32.f32 %v1136
        %v1144 = vmul.f32 %v1143, %v1141
        %v1145 = vxor.u32 %v1144, 2147483648
        %v1146 = vsel %vm1063, %v1145, %v1144
        %v1147 = vsub.s32 4, %v1123
        %v1148 = vsel %vm1063, %v1147, %v1123
        %v1149 = vsel %vm1062, %v427, %v1146
        %v1150 = vsel %vm1062, 0, %v1148
        %v1151 = vcosq.f32.pop %v1149
        %v1152 = vsinq.f32.pop %v1149
        %vm1153 = vweird.f32 %v427
        %v1154 = vadd.s32 %v1150, 3
        %v1155 = vand.u32 %v1154, 3
        %vm1156 = vcmp.lt.s32.totalorder %v1155, 2
        %vm1157 = vcmp.eq.s32.totalorder %v1155, 0
        %v1158 = vxor.u32 %v1152, 2147483648
        %v1159 = vsel %vm1157, %v1151, %v1158
        %vm1160 = vcmp.eq.s32.totalorder %v1155, 2
        %v1161 = vxor.u32 %v1151, 2147483648
        %v1162 = vsel %vm1160, %v1161, %v1152
        %v1163 = vsel %vm1156, %v1159, %v1162
        %v1164 = vsel %vm1153, nan, %v1163
        %v1165 = vand.u32 2147483647, %v428
        %vm1166 = vcmp.le.f32.partialorder %v1165, 0.7853982
        %vm1167 = vcmp.lt.s32.totalorder %v428, 0
        %v1168 = vand.u32 %v428, 2139095040
        %v1169 = vshrl.u32 %v1168, 23
        %v1170 = vsub.s32 %v1169, 127
        %v1171 = vand.u32 2147483647, %v428
        %v1172 = vand.u32 %v1171, 8388607
        %v1173 = vor.u32 %v1172, 8388608
        %v1174 = vsub.s32 0, %v1173
        %v1175 = vadd.s32 %v1170, 1
        %vm1176 = vcmp.gt.s32.totalorder %v1175, 0
        %v1177 = vsel %vm1176, %v1175, 0
        %v1178 = vshrl.u32 %v1177, 5
        %v1179 = vand.u32 %v1177, 31
        %v1180 = vsub.s32 32, %v1179
        %v1181 = vshrl.u32 683565275, %v1180
        %v1182 = vshll.u32 683565275, %v1179
        %v1183 = vshrl.u32 2475754826, %v1180
        %v1184 = vor.u32 %v1182, %v1183
        %v1185 = vshll.u32 2475754826, %v1179
        %v1186 = vshrl.u32 2131351028, %v1180
        %v1187 = vor.u32 %v1185, %v1186
        %v1188 = vshll.u32 2131351028, %v1179
        %v1189 = vshrl.u32 2102212464, %v1180
        %v1190 = vor.u32 %v1188, %v1189
        %v1191 = vshll.u32 2102212464, %v1179
        %v1192 = vshrl.u32 920167782, %v1180
        %v1193 = vor.u32 %v1191, %v1192
        %v1194 = vshll.u32 920167782, %v1179
        %v1195 = vshrl.u32 1326507024, %v1180
        %v1196 = vor.u32 %v1194, %v1195
        %vm1197 = vcmp.lt.s32.totalorder %v1178, 1
        %vm1198 = vcmp.lt.s32.totalorder %v1178, 2
        %vm1199 = vcmp.lt.s32.totalorder %v1178, 3
        %vm1200 = vcmp.lt.s32.totalorder %v1178, 4
        %v1201 = vsel %vm1197, %v1181, %v1184
        %v1202 = vsel %vm1200, %v1190, 2102212464
        %v1203 = vsel %vm1199, %v1187, %v1202
        %v1204 = vsel %vm1198, %v1201, %v1203
        %v1205 = vsel %vm1197, %v1184, %v1187
        %v1206 = vsel %vm1200, %v1193, 920167782
        %v1207 = vsel %vm1199, %v1190, %v1206
        %v1208 = vsel %vm1198, %v1205, %v1207
        %v1209 = vsel %vm1197, %v1187, %v1190
        %v1210 = vsel %vm1200, %v1196, 1326507024
        %v1211 = vsel %vm1199, %v1193, %v1210
        %v1212 = vsel %vm1198, %v1209, %v1211
        %v1213 = vshll.u32 %v1173, 8
        %v1214 = vmul.u32.u64.compose %v1213, %v1212
        %v1215 = vextract.low.u32 %v1214
        %v1216 = vextract.high.u32 %v1214
        %v1217 = vmul.u32.u64.compose %v1213, %v1208
        %v1218 = vextract.low.u32 %v1217
        %v1219 = vextract.high.u32 %v1217
        %v1220 = vmul.u32 %v1213, %v1204
        %v1221 = vadd.s32 %v1216, %v1218
        %vm1222 = vc.u32 %v1216, %v1218
        %v1223 = vadd.s32 %v1219, 1
        %v1224 = vsel %vm1222, %v1223, %v1219
        %v1225 = vadd.s32 %v1220, %v1224
        %v1226 = vadd.s32 %v1225, 536870912
        %v1227 = vshrl.u32 %v1226, 30
        %v1228 = vshll.u32 %v1227, 30
        %v1229 = vsub.s32 %v1225, %v1228
        %vm1230 = vcmp.lt.s32.totalorder %v1229, 0
        %v1231 = vsub.s32 0, %v1229
        %v1232 = vsel %vm1230, %v1231, %v1229
        %v1233 = vclz %v1232
        %v1234 = vsub.s32 %v1233, 2
        %vm1235 = vcmp.gt.s32.totalorder 0, %v1234
        %v1236 = vsel %vm1235, 0, %v1234
        %v1237 = vsub.s32 32, %v1236
        %v1238 = vshll.u32 %v1229, %v1236
        %v1239 = vshrl.u32 %v1221, %v1237
        %v1240 = vor.u32 %v1238, %v1239
        %v1241 = vsub.s32 4294967266, %v1236
        %v1242 = vadd.s32 %v1241, 127
        %v1243 = vshll.u32 %v1242, 23
        %v1244 = vor.u32 4788187, %v1243
        %v1245 = vand.u32 2147483647, %v1244
        %v1247 = vcvt.s32.f32 %v1240
        %v1248 = vmul.f32 %v1247, %v1245
        %v1249 = vxor.u32 %v1248, 2147483648
        %v1250 = vsel %vm1167, %v1249, %v1248
        %v1251 = vsub.s32 4, %v1227
        %v1252 = vsel %vm1167, %v1251, %v1227
        %v1253 = vsel %vm1166, %v428, %v1250
        %v1254 = vsel %vm1166, 0, %v1252
        %v1255 = vcosq.f32.pop %v1253
        %v1256 = vsinq.f32.pop %v1253
        %vm1257 = vweird.f32 %v428
        %v1258 = vadd.s32 %v1254, 3
        %v1259 = vand.u32 %v1258, 3
        %vm1260 = vcmp.lt.s32.totalorder %v1259, 2
        %vm1261 = vcmp.eq.s32.totalorder %v1259, 0
        %v1262 = vxor.u32 %v1256, 2147483648
        %v1263 = vsel %vm1261, %v1255, %v1262
        %vm1264 = vcmp.eq.s32.totalorder %v1259, 2
        %v1265 = vxor.u32 %v1255, 2147483648
        %v1266 = vsel %vm1264, %v1265, %v1256
        %v1267 = vsel %vm1260, %v1263, %v1266
        %v1268 = vsel %vm1257, nan, %v1267
        %v1269 = vand.u32 2147483647, %v429
        %vm1270 = vcmp.le.f32.partialorder %v1269, 0.7853982
        %vm1271 = vcmp.lt.s32.totalorder %v429, 0
        %v1272 = vand.u32 %v429, 2139095040
        %v1273 = vshrl.u32 %v1272, 23
        %v1274 = vsub.s32 %v1273, 127
        %v1275 = vand.u32 2147483647, %v429
        %v1276 = vand.u32 %v1275, 8388607
        %v1277 = vor.u32 %v1276, 8388608
        %v1278 = vsub.s32 0, %v1277
        %v1279 = vadd.s32 %v1274, 1
        %vm1280 = vcmp.gt.s32.totalorder %v1279, 0
        %v1281 = vsel %vm1280, %v1279, 0
        %v1282 = vshrl.u32 %v1281, 5
        %v1283 = vand.u32 %v1281, 31
        %v1284 = vsub.s32 32, %v1283
        %v1285 = vshrl.u32 683565275, %v1284
        %v1286 = vshll.u32 683565275, %v1283
        %v1287 = vshrl.u32 2475754826, %v1284
        %v1288 = vor.u32 %v1286, %v1287
        %v1289 = vshll.u32 2475754826, %v1283
        %v1290 = vshrl.u32 2131351028, %v1284
        %v1291 = vor.u32 %v1289, %v1290
        %v1292 = vshll.u32 2131351028, %v1283
        %v1293 = vshrl.u32 2102212464, %v1284
        %v1294 = vor.u32 %v1292, %v1293
        %v1295 = vshll.u32 2102212464, %v1283
        %v1296 = vshrl.u32 920167782, %v1284
        %v1297 = vor.u32 %v1295, %v1296
        %v1298 = vshll.u32 920167782, %v1283
        %v1299 = vshrl.u32 1326507024, %v1284
        %v1300 = vor.u32 %v1298, %v1299
        %vm1301 = vcmp.lt.s32.totalorder %v1282, 1
        %vm1302 = vcmp.lt.s32.totalorder %v1282, 2
        %vm1303 = vcmp.lt.s32.totalorder %v1282, 3
        %vm1304 = vcmp.lt.s32.totalorder %v1282, 4
        %v1305 = vsel %vm1301, %v1285, %v1288
        %v1306 = vsel %vm1304, %v1294, 2102212464
        %v1307 = vsel %vm1303, %v1291, %v1306
        %v1308 = vsel %vm1302, %v1305, %v1307
        %v1309 = vsel %vm1301, %v1288, %v1291
        %v1310 = vsel %vm1304, %v1297, 920167782
        %v1311 = vsel %vm1303, %v1294, %v1310
        %v1312 = vsel %vm1302, %v1309, %v1311
        %v1313 = vsel %vm1301, %v1291, %v1294
        %v1314 = vsel %vm1304, %v1300, 1326507024
        %v1315 = vsel %vm1303, %v1297, %v1314
        %v1316 = vsel %vm1302, %v1313, %v1315
        %v1317 = vshll.u32 %v1277, 8
        %v1318 = vmul.u32.u64.compose %v1317, %v1316
        %v1319 = vextract.low.u32 %v1318
        %v1320 = vextract.high.u32 %v1318
        %v1321 = vmul.u32.u64.compose %v1317, %v1312
        %v1322 = vextract.low.u32 %v1321
        %v1323 = vextract.high.u32 %v1321
        %v1324 = vmul.u32 %v1317, %v1308
        %v1325 = vadd.s32 %v1320, %v1322
        %vm1326 = vc.u32 %v1320, %v1322
        %v1327 = vadd.s32 %v1323, 1
        %v1328 = vsel %vm1326, %v1327, %v1323
        %v1329 = vadd.s32 %v1324, %v1328
        %v1330 = vadd.s32 %v1329, 536870912
        %v1331 = vshrl.u32 %v1330, 30
        %v1332 = vshll.u32 %v1331, 30
        %v1333 = vsub.s32 %v1329, %v1332
        %vm1334 = vcmp.lt.s32.totalorder %v1333, 0
        %v1335 = vsub.s32 0, %v1333
        %v1336 = vsel %vm1334, %v1335, %v1333
        %v1337 = vclz %v1336
        %v1338 = vsub.s32 %v1337, 2
        %vm1339 = vcmp.gt.s32.totalorder 0, %v1338
        %v1340 = vsel %vm1339, 0, %v1338
        %v1341 = vsub.s32 32, %v1340
        %v1342 = vshll.u32 %v1333, %v1340
        %v1343 = vshrl.u32 %v1325, %v1341
        %v1344 = vor.u32 %v1342, %v1343
        %v1345 = vsub.s32 4294967266, %v1340
        %v1346 = vadd.s32 %v1345, 127
        %v1347 = vshll.u32 %v1346, 23
        %v1348 = vor.u32 4788187, %v1347
        %v1349 = vand.u32 2147483647, %v1348
        %v1351 = vcvt.s32.f32 %v1344
        %v1352 = vmul.f32 %v1351, %v1349
        %v1353 = vxor.u32 %v1352, 2147483648
        %v1354 = vsel %vm1271, %v1353, %v1352
        %v1355 = vsub.s32 4, %v1331
        %v1356 = vsel %vm1271, %v1355, %v1331
        %v1357 = vsel %vm1270, %v429, %v1354
        %v1358 = vsel %vm1270, 0, %v1356
        %v1359 = vcosq.f32.pop %v1357
        %v1360 = vsinq.f32.pop %v1357
        %vm1361 = vweird.f32 %v429
        %v1362 = vadd.s32 %v1358, 3
        %v1363 = vand.u32 %v1362, 3
        %vm1364 = vcmp.lt.s32.totalorder %v1363, 2
        %vm1365 = vcmp.eq.s32.totalorder %v1363, 0
        %v1366 = vxor.u32 %v1360, 2147483648
        %v1367 = vsel %vm1365, %v1359, %v1366
        %vm1368 = vcmp.eq.s32.totalorder %v1363, 2
        %v1369 = vxor.u32 %v1359, 2147483648
        %v1370 = vsel %vm1368, %v1369, %v1360
        %v1371 = vsel %vm1364, %v1367, %v1370
        %v1372 = vsel %vm1361, nan, %v1371
        %v1373 = vand.u32 2147483647, %v430
        %vm1374 = vcmp.le.f32.partialorder %v1373, 0.7853982
        %vm1375 = vcmp.lt.s32.totalorder %v430, 0
        %v1376 = vand.u32 %v430, 2139095040
        %v1377 = vshrl.u32 %v1376, 23
        %v1378 = vsub.s32 %v1377, 127
        %v1379 = vand.u32 2147483647, %v430
        %v1380 = vand.u32 %v1379, 8388607
        %v1381 = vor.u32 %v1380, 8388608
        %v1382 = vsub.s32 0, %v1381
        %v1383 = vadd.s32 %v1378, 1
        %vm1384 = vcmp.gt.s32.totalorder %v1383, 0
        %v1385 = vsel %vm1384, %v1383, 0
        %v1386 = vshrl.u32 %v1385, 5
        %v1387 = vand.u32 %v1385, 31
        %v1388 = vsub.s32 32, %v1387
        %v1389 = vshrl.u32 683565275, %v1388
        %v1390 = vshll.u32 683565275, %v1387
        %v1391 = vshrl.u32 2475754826, %v1388
        %v1392 = vor.u32 %v1390, %v1391
        %v1393 = vshll.u32 2475754826, %v1387
        %v1394 = vshrl.u32 2131351028, %v1388
        %v1395 = vor.u32 %v1393, %v1394
        %v1396 = vshll.u32 2131351028, %v1387
        %v1397 = vshrl.u32 2102212464, %v1388
        %v1398 = vor.u32 %v1396, %v1397
        %v1399 = vshll.u32 2102212464, %v1387
        %v1400 = vshrl.u32 920167782, %v1388
        %v1401 = vor.u32 %v1399, %v1400
        %v1402 = vshll.u32 920167782, %v1387
        %v1403 = vshrl.u32 1326507024, %v1388
        %v1404 = vor.u32 %v1402, %v1403
        %vm1405 = vcmp.lt.s32.totalorder %v1386, 1
        %vm1406 = vcmp.lt.s32.totalorder %v1386, 2
        %vm1407 = vcmp.lt.s32.totalorder %v1386, 3
        %vm1408 = vcmp.lt.s32.totalorder %v1386, 4
        %v1409 = vsel %vm1405, %v1389, %v1392
        %v1410 = vsel %vm1408, %v1398, 2102212464
        %v1411 = vsel %vm1407, %v1395, %v1410
        %v1412 = vsel %vm1406, %v1409, %v1411
        %v1413 = vsel %vm1405, %v1392, %v1395
        %v1414 = vsel %vm1408, %v1401, 920167782
        %v1415 = vsel %vm1407, %v1398, %v1414
        %v1416 = vsel %vm1406, %v1413, %v1415
        %v1417 = vsel %vm1405, %v1395, %v1398
        %v1418 = vsel %vm1408, %v1404, 1326507024
        %v1419 = vsel %vm1407, %v1401, %v1418
        %v1420 = vsel %vm1406, %v1417, %v1419
        %v1421 = vshll.u32 %v1381, 8
        %v1422 = vmul.u32.u64.compose %v1421, %v1420
        %v1423 = vextract.low.u32 %v1422
        %v1424 = vextract.high.u32 %v1422
        %v1425 = vmul.u32.u64.compose %v1421, %v1416
        %v1426 = vextract.low.u32 %v1425
        %v1427 = vextract.high.u32 %v1425
        %v1428 = vmul.u32 %v1421, %v1412
        %v1429 = vadd.s32 %v1424, %v1426
        %vm1430 = vc.u32 %v1424, %v1426
        %v1431 = vadd.s32 %v1427, 1
        %v1432 = vsel %vm1430, %v1431, %v1427
        %v1433 = vadd.s32 %v1428, %v1432
        %v1434 = vadd.s32 %v1433, 536870912
        %v1435 = vshrl.u32 %v1434, 30
        %v1436 = vshll.u32 %v1435, 30
        %v1437 = vsub.s32 %v1433, %v1436
        %vm1438 = vcmp.lt.s32.totalorder %v1437, 0
        %v1439 = vsub.s32 0, %v1437
        %v1440 = vsel %vm1438, %v1439, %v1437
        %v1441 = vclz %v1440
        %v1442 = vsub.s32 %v1441, 2
        %vm1443 = vcmp.gt.s32.totalorder 0, %v1442
        %v1444 = vsel %vm1443, 0, %v1442
        %v1445 = vsub.s32 32, %v1444
        %v1446 = vshll.u32 %v1437, %v1444
        %v1447 = vshrl.u32 %v1429, %v1445
        %v1448 = vor.u32 %v1446, %v1447
        %v1449 = vsub.s32 4294967266, %v1444
        %v1450 = vadd.s32 %v1449, 127
        %v1451 = vshll.u32 %v1450, 23
        %v1452 = vor.u32 4788187, %v1451
        %v1453 = vand.u32 2147483647, %v1452
        %v1455 = vcvt.s32.f32 %v1448
        %v1456 = vmul.f32 %v1455, %v1453
        %v1457 = vxor.u32 %v1456, 2147483648
        %v1458 = vsel %vm1375, %v1457, %v1456
        %v1459 = vsub.s32 4, %v1435
        %v1460 = vsel %vm1375, %v1459, %v1435
        %v1461 = vsel %vm1374, %v430, %v1458
        %v1462 = vsel %vm1374, 0, %v1460
        %v1463 = vcosq.f32.pop %v1461
        %v1464 = vsinq.f32.pop %v1461
        %vm1465 = vweird.f32 %v430
        %v1466 = vadd.s32 %v1462, 3
        %v1467 = vand.u32 %v1466, 3
        %vm1468 = vcmp.lt.s32.totalorder %v1467, 2
        %vm1469 = vcmp.eq.s32.totalorder %v1467, 0
        %v1470 = vxor.u32 %v1464, 2147483648
        %v1471 = vsel %vm1469, %v1463, %v1470
        %vm1472 = vcmp.eq.s32.totalorder %v1467, 2
        %v1473 = vxor.u32 %v1463, 2147483648
        %v1474 = vsel %vm1472, %v1473, %v1464
        %v1475 = vsel %vm1468, %v1471, %v1474
        %v1476 = vsel %vm1465, nan, %v1475
        %v1477 = vand.u32 2147483647, %v431
        %vm1478 = vcmp.le.f32.partialorder %v1477, 0.7853982
        %vm1479 = vcmp.lt.s32.totalorder %v431, 0
        %v1480 = vand.u32 %v431, 2139095040
        %v1481 = vshrl.u32 %v1480, 23
        %v1482 = vsub.s32 %v1481, 127
        %v1483 = vand.u32 2147483647, %v431
        %v1484 = vand.u32 %v1483, 8388607
        %v1485 = vor.u32 %v1484, 8388608
        %v1486 = vsub.s32 0, %v1485
        %v1487 = vadd.s32 %v1482, 1
        %vm1488 = vcmp.gt.s32.totalorder %v1487, 0
        %v1489 = vsel %vm1488, %v1487, 0
        %v1490 = vshrl.u32 %v1489, 5
        %v1491 = vand.u32 %v1489, 31
        %v1492 = vsub.s32 32, %v1491
        %v1493 = vshrl.u32 683565275, %v1492
        %v1494 = vshll.u32 683565275, %v1491
        %v1495 = vshrl.u32 2475754826, %v1492
        %v1496 = vor.u32 %v1494, %v1495
        %v1497 = vshll.u32 2475754826, %v1491
        %v1498 = vshrl.u32 2131351028, %v1492
        %v1499 = vor.u32 %v1497, %v1498
        %v1500 = vshll.u32 2131351028, %v1491
        %v1501 = vshrl.u32 2102212464, %v1492
        %v1502 = vor.u32 %v1500, %v1501
        %v1503 = vshll.u32 2102212464, %v1491
        %v1504 = vshrl.u32 920167782, %v1492
        %v1505 = vor.u32 %v1503, %v1504
        %v1506 = vshll.u32 920167782, %v1491
        %v1507 = vshrl.u32 1326507024, %v1492
        %v1508 = vor.u32 %v1506, %v1507
        %vm1509 = vcmp.lt.s32.totalorder %v1490, 1
        %vm1510 = vcmp.lt.s32.totalorder %v1490, 2
        %vm1511 = vcmp.lt.s32.totalorder %v1490, 3
        %vm1512 = vcmp.lt.s32.totalorder %v1490, 4
        %v1513 = vsel %vm1509, %v1493, %v1496
        %v1514 = vsel %vm1512, %v1502, 2102212464
        %v1515 = vsel %vm1511, %v1499, %v1514
        %v1516 = vsel %vm1510, %v1513, %v1515
        %v1517 = vsel %vm1509, %v1496, %v1499
        %v1518 = vsel %vm1512, %v1505, 920167782
        %v1519 = vsel %vm1511, %v1502, %v1518
        %v1520 = vsel %vm1510, %v1517, %v1519
        %v1521 = vsel %vm1509, %v1499, %v1502
        %v1522 = vsel %vm1512, %v1508, 1326507024
        %v1523 = vsel %vm1511, %v1505, %v1522
        %v1524 = vsel %vm1510, %v1521, %v1523
        %v1525 = vshll.u32 %v1485, 8
        %v1526 = vmul.u32.u64.compose %v1525, %v1524
        %v1527 = vextract.low.u32 %v1526
        %v1528 = vextract.high.u32 %v1526
        %v1529 = vmul.u32.u64.compose %v1525, %v1520
        %v1530 = vextract.low.u32 %v1529
        %v1531 = vextract.high.u32 %v1529
        %v1532 = vmul.u32 %v1525, %v1516
        %v1533 = vadd.s32 %v1528, %v1530
        %vm1534 = vc.u32 %v1528, %v1530
        %v1535 = vadd.s32 %v1531, 1
        %v1536 = vsel %vm1534, %v1535, %v1531
        %v1537 = vadd.s32 %v1532, %v1536
        %v1538 = vadd.s32 %v1537, 536870912
        %v1539 = vshrl.u32 %v1538, 30
        %v1540 = vshll.u32 %v1539, 30
        %v1541 = vsub.s32 %v1537, %v1540
        %vm1542 = vcmp.lt.s32.totalorder %v1541, 0
        %v1543 = vsub.s32 0, %v1541
        %v1544 = vsel %vm1542, %v1543, %v1541
        %v1545 = vclz %v1544
        %v1546 = vsub.s32 %v1545, 2
        %vm1547 = vcmp.gt.s32.totalorder 0, %v1546
        %v1548 = vsel %vm1547, 0, %v1546
        %v1549 = vsub.s32 32, %v1548
        %v1550 = vshll.u32 %v1541, %v1548
        %v1551 = vshrl.u32 %v1533, %v1549
        %v1552 = vor.u32 %v1550, %v1551
        %v1553 = vsub.s32 4294967266, %v1548
        %v1554 = vadd.s32 %v1553, 127
        %v1555 = vshll.u32 %v1554, 23
        %v1556 = vor.u32 4788187, %v1555
        %v1557 = vand.u32 2147483647, %v1556
        %v1559 = vcvt.s32.f32 %v1552
        %v1560 = vmul.f32 %v1559, %v1557
        %v1561 = vxor.u32 %v1560, 2147483648
        %v1562 = vsel %vm1479, %v1561, %v1560
        %v1563 = vsub.s32 4, %v1539
        %v1564 = vsel %vm1479, %v1563, %v1539
        %v1565 = vsel %vm1478, %v431, %v1562
        %v1566 = vsel %vm1478, 0, %v1564
        %v1567 = vcosq.f32.pop %v1565
        %v1568 = vsinq.f32.pop %v1565
        %vm1569 = vweird.f32 %v431
        %v1570 = vadd.s32 %v1566, 3
        %v1571 = vand.u32 %v1570, 3
        %vm1572 = vcmp.lt.s32.totalorder %v1571, 2
        %vm1573 = vcmp.eq.s32.totalorder %v1571, 0
        %v1574 = vxor.u32 %v1568, 2147483648
        %v1575 = vsel %vm1573, %v1567, %v1574
        %vm1576 = vcmp.eq.s32.totalorder %v1571, 2
        %v1577 = vxor.u32 %v1567, 2147483648
        %v1578 = vsel %vm1576, %v1577, %v1568
        %v1579 = vsel %vm1572, %v1575, %v1578
        %v1580 = vsel %vm1569, nan, %v1579
        %v1581 = vand.u32 2147483647, %v432
        %vm1582 = vcmp.le.f32.partialorder %v1581, 0.7853982
        %vm1583 = vcmp.lt.s32.totalorder %v432, 0
        %v1584 = vand.u32 %v432, 2139095040
        %v1585 = vshrl.u32 %v1584, 23
        %v1586 = vsub.s32 %v1585, 127
        %v1587 = vand.u32 2147483647, %v432
        %v1588 = vand.u32 %v1587, 8388607
        %v1589 = vor.u32 %v1588, 8388608
        %v1590 = vsub.s32 0, %v1589
        %v1591 = vadd.s32 %v1586, 1
        %vm1592 = vcmp.gt.s32.totalorder %v1591, 0
        %v1593 = vsel %vm1592, %v1591, 0
        %v1594 = vshrl.u32 %v1593, 5
        %v1595 = vand.u32 %v1593, 31
        %v1596 = vsub.s32 32, %v1595
        %v1597 = vshrl.u32 683565275, %v1596
        %v1598 = vshll.u32 683565275, %v1595
        %v1599 = vshrl.u32 2475754826, %v1596
        %v1600 = vor.u32 %v1598, %v1599
        %v1601 = vshll.u32 2475754826, %v1595
        %v1602 = vshrl.u32 2131351028, %v1596
        %v1603 = vor.u32 %v1601, %v1602
        %v1604 = vshll.u32 2131351028, %v1595
        %v1605 = vshrl.u32 2102212464, %v1596
        %v1606 = vor.u32 %v1604, %v1605
        %v1607 = vshll.u32 2102212464, %v1595
        %v1608 = vshrl.u32 920167782, %v1596
        %v1609 = vor.u32 %v1607, %v1608
        %v1610 = vshll.u32 920167782, %v1595
        %v1611 = vshrl.u32 1326507024, %v1596
        %v1612 = vor.u32 %v1610, %v1611
        %vm1613 = vcmp.lt.s32.totalorder %v1594, 1
        %vm1614 = vcmp.lt.s32.totalorder %v1594, 2
        %vm1615 = vcmp.lt.s32.totalorder %v1594, 3
        %vm1616 = vcmp.lt.s32.totalorder %v1594, 4
        %v1617 = vsel %vm1613, %v1597, %v1600
        %v1618 = vsel %vm1616, %v1606, 2102212464
        %v1619 = vsel %vm1615, %v1603, %v1618
        %v1620 = vsel %vm1614, %v1617, %v1619
        %v1621 = vsel %vm1613, %v1600, %v1603
        %v1622 = vsel %vm1616, %v1609, 920167782
        %v1623 = vsel %vm1615, %v1606, %v1622
        %v1624 = vsel %vm1614, %v1621, %v1623
        %v1625 = vsel %vm1613, %v1603, %v1606
        %v1626 = vsel %vm1616, %v1612, 1326507024
        %v1627 = vsel %vm1615, %v1609, %v1626
        %v1628 = vsel %vm1614, %v1625, %v1627
        %v1629 = vshll.u32 %v1589, 8
        %v1630 = vmul.u32.u64.compose %v1629, %v1628
        %v1631 = vextract.low.u32 %v1630
        %v1632 = vextract.high.u32 %v1630
        %v1633 = vmul.u32.u64.compose %v1629, %v1624
        %v1634 = vextract.low.u32 %v1633
        %v1635 = vextract.high.u32 %v1633
        %v1636 = vmul.u32 %v1629, %v1620
        %v1637 = vadd.s32 %v1632, %v1634
        %vm1638 = vc.u32 %v1632, %v1634
        %v1639 = vadd.s32 %v1635, 1
        %v1640 = vsel %vm1638, %v1639, %v1635
        %v1641 = vadd.s32 %v1636, %v1640
        %v1642 = vadd.s32 %v1641, 536870912
        %v1643 = vshrl.u32 %v1642, 30
        %v1644 = vshll.u32 %v1643, 30
        %v1645 = vsub.s32 %v1641, %v1644
        %vm1646 = vcmp.lt.s32.totalorder %v1645, 0
        %v1647 = vsub.s32 0, %v1645
        %v1648 = vsel %vm1646, %v1647, %v1645
        %v1649 = vclz %v1648
        %v1650 = vsub.s32 %v1649, 2
        %vm1651 = vcmp.gt.s32.totalorder 0, %v1650
        %v1652 = vsel %vm1651, 0, %v1650
        %v1653 = vsub.s32 32, %v1652
        %v1654 = vshll.u32 %v1645, %v1652
        %v1655 = vshrl.u32 %v1637, %v1653
        %v1656 = vor.u32 %v1654, %v1655
        %v1657 = vsub.s32 4294967266, %v1652
        %v1658 = vadd.s32 %v1657, 127
        %v1659 = vshll.u32 %v1658, 23
        %v1660 = vor.u32 4788187, %v1659
        %v1661 = vand.u32 2147483647, %v1660
        %v1663 = vcvt.s32.f32 %v1656
        %v1664 = vmul.f32 %v1663, %v1661
        %v1665 = vxor.u32 %v1664, 2147483648
        %v1666 = vsel %vm1583, %v1665, %v1664
        %v1667 = vsub.s32 4, %v1643
        %v1668 = vsel %vm1583, %v1667, %v1643
        %v1669 = vsel %vm1582, %v432, %v1666
        %v1670 = vsel %vm1582, 0, %v1668
        %v1671 = vcosq.f32.pop %v1669
        %v1672 = vsinq.f32.pop %v1669
        %vm1673 = vweird.f32 %v432
        %v1674 = vadd.s32 %v1670, 3
        %v1675 = vand.u32 %v1674, 3
        %vm1676 = vcmp.lt.s32.totalorder %v1675, 2
        %vm1677 = vcmp.eq.s32.totalorder %v1675, 0
        %v1678 = vxor.u32 %v1672, 2147483648
        %v1679 = vsel %vm1677, %v1671, %v1678
        %vm1680 = vcmp.eq.s32.totalorder %v1675, 2
        %v1681 = vxor.u32 %v1671, 2147483648
        %v1682 = vsel %vm1680, %v1681, %v1672
        %v1683 = vsel %vm1676, %v1679, %v1682
        %v1684 = vsel %vm1673, nan, %v1683
        %v1685 = vand.u32 2147483647, %v433
        %vm1686 = vcmp.le.f32.partialorder %v1685, 0.7853982
        %vm1687 = vcmp.lt.s32.totalorder %v433, 0
        %v1688 = vand.u32 %v433, 2139095040
        %v1689 = vshrl.u32 %v1688, 23
        %v1690 = vsub.s32 %v1689, 127
        %v1691 = vand.u32 2147483647, %v433
        %v1692 = vand.u32 %v1691, 8388607
        %v1693 = vor.u32 %v1692, 8388608
        %v1694 = vsub.s32 0, %v1693
        %v1695 = vadd.s32 %v1690, 1
        %vm1696 = vcmp.gt.s32.totalorder %v1695, 0
        %v1697 = vsel %vm1696, %v1695, 0
        %v1698 = vshrl.u32 %v1697, 5
        %v1699 = vand.u32 %v1697, 31
        %v1700 = vsub.s32 32, %v1699
        %v1701 = vshrl.u32 683565275, %v1700
        %v1702 = vshll.u32 683565275, %v1699
        %v1703 = vshrl.u32 2475754826, %v1700
        %v1704 = vor.u32 %v1702, %v1703
        %v1705 = vshll.u32 2475754826, %v1699
        %v1706 = vshrl.u32 2131351028, %v1700
        %v1707 = vor.u32 %v1705, %v1706
        %v1708 = vshll.u32 2131351028, %v1699
        %v1709 = vshrl.u32 2102212464, %v1700
        %v1710 = vor.u32 %v1708, %v1709
        %v1711 = vshll.u32 2102212464, %v1699
        %v1712 = vshrl.u32 920167782, %v1700
        %v1713 = vor.u32 %v1711, %v1712
        %v1714 = vshll.u32 920167782, %v1699
        %v1715 = vshrl.u32 1326507024, %v1700
        %v1716 = vor.u32 %v1714, %v1715
        %vm1717 = vcmp.lt.s32.totalorder %v1698, 1
        %vm1718 = vcmp.lt.s32.totalorder %v1698, 2
        %vm1719 = vcmp.lt.s32.totalorder %v1698, 3
        %vm1720 = vcmp.lt.s32.totalorder %v1698, 4
        %v1721 = vsel %vm1717, %v1701, %v1704
        %v1722 = vsel %vm1720, %v1710, 2102212464
        %v1723 = vsel %vm1719, %v1707, %v1722
        %v1724 = vsel %vm1718, %v1721, %v1723
        %v1725 = vsel %vm1717, %v1704, %v1707
        %v1726 = vsel %vm1720, %v1713, 920167782
        %v1727 = vsel %vm1719, %v1710, %v1726
        %v1728 = vsel %vm1718, %v1725, %v1727
        %v1729 = vsel %vm1717, %v1707, %v1710
        %v1730 = vsel %vm1720, %v1716, 1326507024
        %v1731 = vsel %vm1719, %v1713, %v1730
        %v1732 = vsel %vm1718, %v1729, %v1731
        %v1733 = vshll.u32 %v1693, 8
        %v1734 = vmul.u32.u64.compose %v1733, %v1732
        %v1735 = vextract.low.u32 %v1734
        %v1736 = vextract.high.u32 %v1734
        %v1737 = vmul.u32.u64.compose %v1733, %v1728
        %v1738 = vextract.low.u32 %v1737
        %v1739 = vextract.high.u32 %v1737
        %v1740 = vmul.u32 %v1733, %v1724
        %v1741 = vadd.s32 %v1736, %v1738
        %vm1742 = vc.u32 %v1736, %v1738
        %v1743 = vadd.s32 %v1739, 1
        %v1744 = vsel %vm1742, %v1743, %v1739
        %v1745 = vadd.s32 %v1740, %v1744
        %v1746 = vadd.s32 %v1745, 536870912
        %v1747 = vshrl.u32 %v1746, 30
        %v1748 = vshll.u32 %v1747, 30
        %v1749 = vsub.s32 %v1745, %v1748
        %vm1750 = vcmp.lt.s32.totalorder %v1749, 0
        %v1751 = vsub.s32 0, %v1749
        %v1752 = vsel %vm1750, %v1751, %v1749
        %v1753 = vclz %v1752
        %v1754 = vsub.s32 %v1753, 2
        %vm1755 = vcmp.gt.s32.totalorder 0, %v1754
        %v1756 = vsel %vm1755, 0, %v1754
        %v1757 = vsub.s32 32, %v1756
        %v1758 = vshll.u32 %v1749, %v1756
        %v1759 = vshrl.u32 %v1741, %v1757
        %v1760 = vor.u32 %v1758, %v1759
        %v1761 = vsub.s32 4294967266, %v1756
        %v1762 = vadd.s32 %v1761, 127
        %v1763 = vshll.u32 %v1762, 23
        %v1764 = vor.u32 4788187, %v1763
        %v1765 = vand.u32 2147483647, %v1764
        %v1767 = vcvt.s32.f32 %v1760
        %v1768 = vmul.f32 %v1767, %v1765
        %v1769 = vxor.u32 %v1768, 2147483648
        %v1770 = vsel %vm1687, %v1769, %v1768
        %v1771 = vsub.s32 4, %v1747
        %v1772 = vsel %vm1687, %v1771, %v1747
        %v1773 = vsel %vm1686, %v433, %v1770
        %v1774 = vsel %vm1686, 0, %v1772
        %v1775 = vcosq.f32.pop %v1773
        %v1776 = vsinq.f32.pop %v1773
        %vm1777 = vweird.f32 %v433
        %v1778 = vadd.s32 %v1774, 3
        %v1779 = vand.u32 %v1778, 3
        %vm1780 = vcmp.lt.s32.totalorder %v1779, 2
        %vm1781 = vcmp.eq.s32.totalorder %v1779, 0
        %v1782 = vxor.u32 %v1776, 2147483648
        %v1783 = vsel %vm1781, %v1775, %v1782
        %vm1784 = vcmp.eq.s32.totalorder %v1779, 2
        %v1785 = vxor.u32 %v1775, 2147483648
        %v1786 = vsel %vm1784, %v1785, %v1776
        %v1787 = vsel %vm1780, %v1783, %v1786
        %v1788 = vsel %vm1777, nan, %v1787
        %v1789 = vand.u32 2147483647, %v434
        %vm1790 = vcmp.le.f32.partialorder %v1789, 0.7853982
        %vm1791 = vcmp.lt.s32.totalorder %v434, 0
        %v1792 = vand.u32 %v434, 2139095040
        %v1793 = vshrl.u32 %v1792, 23
        %v1794 = vsub.s32 %v1793, 127
        %v1795 = vand.u32 2147483647, %v434
        %v1796 = vand.u32 %v1795, 8388607
        %v1797 = vor.u32 %v1796, 8388608
        %v1798 = vsub.s32 0, %v1797
        %v1799 = vadd.s32 %v1794, 1
        %vm1800 = vcmp.gt.s32.totalorder %v1799, 0
        %v1801 = vsel %vm1800, %v1799, 0
        %v1802 = vshrl.u32 %v1801, 5
        %v1803 = vand.u32 %v1801, 31
        %v1804 = vsub.s32 32, %v1803
        %v1805 = vshrl.u32 683565275, %v1804
        %v1806 = vshll.u32 683565275, %v1803
        %v1807 = vshrl.u32 2475754826, %v1804
        %v1808 = vor.u32 %v1806, %v1807
        %v1809 = vshll.u32 2475754826, %v1803
        %v1810 = vshrl.u32 2131351028, %v1804
        %v1811 = vor.u32 %v1809, %v1810
        %v1812 = vshll.u32 2131351028, %v1803
        %v1813 = vshrl.u32 2102212464, %v1804
        %v1814 = vor.u32 %v1812, %v1813
        %v1815 = vshll.u32 2102212464, %v1803
        %v1816 = vshrl.u32 920167782, %v1804
        %v1817 = vor.u32 %v1815, %v1816
        %v1818 = vshll.u32 920167782, %v1803
        %v1819 = vshrl.u32 1326507024, %v1804
        %v1820 = vor.u32 %v1818, %v1819
        %vm1821 = vcmp.lt.s32.totalorder %v1802, 1
        %vm1822 = vcmp.lt.s32.totalorder %v1802, 2
        %vm1823 = vcmp.lt.s32.totalorder %v1802, 3
        %vm1824 = vcmp.lt.s32.totalorder %v1802, 4
        %v1825 = vsel %vm1821, %v1805, %v1808
        %v1826 = vsel %vm1824, %v1814, 2102212464
        %v1827 = vsel %vm1823, %v1811, %v1826
        %v1828 = vsel %vm1822, %v1825, %v1827
        %v1829 = vsel %vm1821, %v1808, %v1811
        %v1830 = vsel %vm1824, %v1817, 920167782
        %v1831 = vsel %vm1823, %v1814, %v1830
        %v1832 = vsel %vm1822, %v1829, %v1831
        %v1833 = vsel %vm1821, %v1811, %v1814
        %v1834 = vsel %vm1824, %v1820, 1326507024
        %v1835 = vsel %vm1823, %v1817, %v1834
        %v1836 = vsel %vm1822, %v1833, %v1835
        %v1837 = vshll.u32 %v1797, 8
        %v1838 = vmul.u32.u64.compose %v1837, %v1836
        %v1839 = vextract.low.u32 %v1838
        %v1840 = vextract.high.u32 %v1838
        %v1841 = vmul.u32.u64.compose %v1837, %v1832
        %v1842 = vextract.low.u32 %v1841
        %v1843 = vextract.high.u32 %v1841
        %v1844 = vmul.u32 %v1837, %v1828
        %v1845 = vadd.s32 %v1840, %v1842
        %vm1846 = vc.u32 %v1840, %v1842
        %v1847 = vadd.s32 %v1843, 1
        %v1848 = vsel %vm1846, %v1847, %v1843
        %v1849 = vadd.s32 %v1844, %v1848
        %v1850 = vadd.s32 %v1849, 536870912
        %v1851 = vshrl.u32 %v1850, 30
        %v1852 = vshll.u32 %v1851, 30
        %v1853 = vsub.s32 %v1849, %v1852
        %vm1854 = vcmp.lt.s32.totalorder %v1853, 0
        %v1855 = vsub.s32 0, %v1853
        %v1856 = vsel %vm1854, %v1855, %v1853
        %v1857 = vclz %v1856
        %v1858 = vsub.s32 %v1857, 2
        %vm1859 = vcmp.gt.s32.totalorder 0, %v1858
        %v1860 = vsel %vm1859, 0, %v1858
        %v1861 = vsub.s32 32, %v1860
        %v1862 = vshll.u32 %v1853, %v1860
        %v1863 = vshrl.u32 %v1845, %v1861
        %v1864 = vor.u32 %v1862, %v1863
        %v1865 = vsub.s32 4294967266, %v1860
        %v1866 = vadd.s32 %v1865, 127
        %v1867 = vshll.u32 %v1866, 23
        %v1868 = vor.u32 4788187, %v1867
        %v1869 = vand.u32 2147483647, %v1868
        %v1871 = vcvt.s32.f32 %v1864
        %v1872 = vmul.f32 %v1871, %v1869
        %v1873 = vxor.u32 %v1872, 2147483648
        %v1874 = vsel %vm1791, %v1873, %v1872
        %v1875 = vsub.s32 4, %v1851
        %v1876 = vsel %vm1791, %v1875, %v1851
        %v1877 = vsel %vm1790, %v434, %v1874
        %v1878 = vsel %vm1790, 0, %v1876
        %v1879 = vcosq.f32.pop %v1877
        %v1880 = vsinq.f32.pop %v1877
        %vm1881 = vweird.f32 %v434
        %v1882 = vadd.s32 %v1878, 3
        %v1883 = vand.u32 %v1882, 3
        %vm1884 = vcmp.lt.s32.totalorder %v1883, 2
        %vm1885 = vcmp.eq.s32.totalorder %v1883, 0
        %v1886 = vxor.u32 %v1880, 2147483648
        %v1887 = vsel %vm1885, %v1879, %v1886
        %vm1888 = vcmp.eq.s32.totalorder %v1883, 2
        %v1889 = vxor.u32 %v1879, 2147483648
        %v1890 = vsel %vm1888, %v1889, %v1880
        %v1891 = vsel %vm1884, %v1887, %v1890
        %v1892 = vsel %vm1881, nan, %v1891
        %v1893 = vand.u32 2147483647, %v435
        %vm1894 = vcmp.le.f32.partialorder %v1893, 0.7853982
        %vm1895 = vcmp.lt.s32.totalorder %v435, 0
        %v1896 = vand.u32 %v435, 2139095040
        %v1897 = vshrl.u32 %v1896, 23
        %v1898 = vsub.s32 %v1897, 127
        %v1899 = vand.u32 2147483647, %v435
        %v1900 = vand.u32 %v1899, 8388607
        %v1901 = vor.u32 %v1900, 8388608
        %v1902 = vsub.s32 0, %v1901
        %v1903 = vadd.s32 %v1898, 1
        %vm1904 = vcmp.gt.s32.totalorder %v1903, 0
        %v1905 = vsel %vm1904, %v1903, 0
        %v1906 = vshrl.u32 %v1905, 5
        %v1907 = vand.u32 %v1905, 31
        %v1908 = vsub.s32 32, %v1907
        %v1909 = vshrl.u32 683565275, %v1908
        %v1910 = vshll.u32 683565275, %v1907
        %v1911 = vshrl.u32 2475754826, %v1908
        %v1912 = vor.u32 %v1910, %v1911
        %v1913 = vshll.u32 2475754826, %v1907
        %v1914 = vshrl.u32 2131351028, %v1908
        %v1915 = vor.u32 %v1913, %v1914
        %v1916 = vshll.u32 2131351028, %v1907
        %v1917 = vshrl.u32 2102212464, %v1908
        %v1918 = vor.u32 %v1916, %v1917
        %v1919 = vshll.u32 2102212464, %v1907
        %v1920 = vshrl.u32 920167782, %v1908
        %v1921 = vor.u32 %v1919, %v1920
        %v1922 = vshll.u32 920167782, %v1907
        %v1923 = vshrl.u32 1326507024, %v1908
        %v1924 = vor.u32 %v1922, %v1923
        %vm1925 = vcmp.lt.s32.totalorder %v1906, 1
        %vm1926 = vcmp.lt.s32.totalorder %v1906, 2
        %vm1927 = vcmp.lt.s32.totalorder %v1906, 3
        %vm1928 = vcmp.lt.s32.totalorder %v1906, 4
        %v1929 = vsel %vm1925, %v1909, %v1912
        %v1930 = vsel %vm1928, %v1918, 2102212464
        %v1931 = vsel %vm1927, %v1915, %v1930
        %v1932 = vsel %vm1926, %v1929, %v1931
        %v1933 = vsel %vm1925, %v1912, %v1915
        %v1934 = vsel %vm1928, %v1921, 920167782
        %v1935 = vsel %vm1927, %v1918, %v1934
        %v1936 = vsel %vm1926, %v1933, %v1935
        %v1937 = vsel %vm1925, %v1915, %v1918
        %v1938 = vsel %vm1928, %v1924, 1326507024
        %v1939 = vsel %vm1927, %v1921, %v1938
        %v1940 = vsel %vm1926, %v1937, %v1939
        %v1941 = vshll.u32 %v1901, 8
        %v1942 = vmul.u32.u64.compose %v1941, %v1940
        %v1943 = vextract.low.u32 %v1942
        %v1944 = vextract.high.u32 %v1942
        %v1945 = vmul.u32.u64.compose %v1941, %v1936
        %v1946 = vextract.low.u32 %v1945
        %v1947 = vextract.high.u32 %v1945
        %v1948 = vmul.u32 %v1941, %v1932
        %v1949 = vadd.s32 %v1944, %v1946
        %vm1950 = vc.u32 %v1944, %v1946
        %v1951 = vadd.s32 %v1947, 1
        %v1952 = vsel %vm1950, %v1951, %v1947
        %v1953 = vadd.s32 %v1948, %v1952
        %v1954 = vadd.s32 %v1953, 536870912
        %v1955 = vshrl.u32 %v1954, 30
        %v1956 = vshll.u32 %v1955, 30
        %v1957 = vsub.s32 %v1953, %v1956
        %vm1958 = vcmp.lt.s32.totalorder %v1957, 0
        %v1959 = vsub.s32 0, %v1957
        %v1960 = vsel %vm1958, %v1959, %v1957
        %v1961 = vclz %v1960
        %v1962 = vsub.s32 %v1961, 2
        %vm1963 = vcmp.gt.s32.totalorder 0, %v1962
        %v1964 = vsel %vm1963, 0, %v1962
        %v1965 = vsub.s32 32, %v1964
        %v1966 = vshll.u32 %v1957, %v1964
        %v1967 = vshrl.u32 %v1949, %v1965
        %v1968 = vor.u32 %v1966, %v1967
        %v1969 = vsub.s32 4294967266, %v1964
        %v1970 = vadd.s32 %v1969, 127
        %v1971 = vshll.u32 %v1970, 23
        %v1972 = vor.u32 4788187, %v1971
        %v1973 = vand.u32 2147483647, %v1972
        %v1975 = vcvt.s32.f32 %v1968
        %v1976 = vmul.f32 %v1975, %v1973
        %v1977 = vxor.u32 %v1976, 2147483648
        %v1978 = vsel %vm1895, %v1977, %v1976
        %v1979 = vsub.s32 4, %v1955
        %v1980 = vsel %vm1895, %v1979, %v1955
        %v1981 = vsel %vm1894, %v435, %v1978
        %v1982 = vsel %vm1894, 0, %v1980
        %v1983 = vcosq.f32.pop %v1981
        %v1984 = vsinq.f32.pop %v1981
        %vm1985 = vweird.f32 %v435
        %v1986 = vadd.s32 %v1982, 3
        %v1987 = vand.u32 %v1986, 3
        %vm1988 = vcmp.lt.s32.totalorder %v1987, 2
        %vm1989 = vcmp.eq.s32.totalorder %v1987, 0
        %v1990 = vxor.u32 %v1984, 2147483648
        %v1991 = vsel %vm1989, %v1983, %v1990
        %vm1992 = vcmp.eq.s32.totalorder %v1987, 2
        %v1993 = vxor.u32 %v1983, 2147483648
        %v1994 = vsel %vm1992, %v1993, %v1984
        %v1995 = vsel %vm1988, %v1991, %v1994
        %v1996 = vsel %vm1985, nan, %v1995
        %v1997 = vand.u32 2147483647, %v436
        %vm1998 = vcmp.le.f32.partialorder %v1997, 0.7853982
        %vm1999 = vcmp.lt.s32.totalorder %v436, 0
        %v2000 = vand.u32 %v436, 2139095040
        %v2001 = vshrl.u32 %v2000, 23
        %v2002 = vsub.s32 %v2001, 127
        %v2003 = vand.u32 2147483647, %v436
        %v2004 = vand.u32 %v2003, 8388607
        %v2005 = vor.u32 %v2004, 8388608
        %v2006 = vsub.s32 0, %v2005
        %v2007 = vadd.s32 %v2002, 1
        %vm2008 = vcmp.gt.s32.totalorder %v2007, 0
        %v2009 = vsel %vm2008, %v2007, 0
        %v2010 = vshrl.u32 %v2009, 5
        %v2011 = vand.u32 %v2009, 31
        %v2012 = vsub.s32 32, %v2011
        %v2013 = vshrl.u32 683565275, %v2012
        %v2014 = vshll.u32 683565275, %v2011
        %v2015 = vshrl.u32 2475754826, %v2012
        %v2016 = vor.u32 %v2014, %v2015
        %v2017 = vshll.u32 2475754826, %v2011
        %v2018 = vshrl.u32 2131351028, %v2012
        %v2019 = vor.u32 %v2017, %v2018
        %v2020 = vshll.u32 2131351028, %v2011
        %v2021 = vshrl.u32 2102212464, %v2012
        %v2022 = vor.u32 %v2020, %v2021
        %v2023 = vshll.u32 2102212464, %v2011
        %v2024 = vshrl.u32 920167782, %v2012
        %v2025 = vor.u32 %v2023, %v2024
        %v2026 = vshll.u32 920167782, %v2011
        %v2027 = vshrl.u32 1326507024, %v2012
        %v2028 = vor.u32 %v2026, %v2027
        %vm2029 = vcmp.lt.s32.totalorder %v2010, 1
        %vm2030 = vcmp.lt.s32.totalorder %v2010, 2
        %vm2031 = vcmp.lt.s32.totalorder %v2010, 3
        %vm2032 = vcmp.lt.s32.totalorder %v2010, 4
        %v2033 = vsel %vm2029, %v2013, %v2016
        %v2034 = vsel %vm2032, %v2022, 2102212464
        %v2035 = vsel %vm2031, %v2019, %v2034
        %v2036 = vsel %vm2030, %v2033, %v2035
        %v2037 = vsel %vm2029, %v2016, %v2019
        %v2038 = vsel %vm2032, %v2025, 920167782
        %v2039 = vsel %vm2031, %v2022, %v2038
        %v2040 = vsel %vm2030, %v2037, %v2039
        %v2041 = vsel %vm2029, %v2019, %v2022
        %v2042 = vsel %vm2032, %v2028, 1326507024
        %v2043 = vsel %vm2031, %v2025, %v2042
        %v2044 = vsel %vm2030, %v2041, %v2043
        %v2045 = vshll.u32 %v2005, 8
        %v2046 = vmul.u32.u64.compose %v2045, %v2044
        %v2047 = vextract.low.u32 %v2046
        %v2048 = vextract.high.u32 %v2046
        %v2049 = vmul.u32.u64.compose %v2045, %v2040
        %v2050 = vextract.low.u32 %v2049
        %v2051 = vextract.high.u32 %v2049
        %v2052 = vmul.u32 %v2045, %v2036
        %v2053 = vadd.s32 %v2048, %v2050
        %vm2054 = vc.u32 %v2048, %v2050
        %v2055 = vadd.s32 %v2051, 1
        %v2056 = vsel %vm2054, %v2055, %v2051
        %v2057 = vadd.s32 %v2052, %v2056
        %v2058 = vadd.s32 %v2057, 536870912
        %v2059 = vshrl.u32 %v2058, 30
        %v2060 = vshll.u32 %v2059, 30
        %v2061 = vsub.s32 %v2057, %v2060
        %vm2062 = vcmp.lt.s32.totalorder %v2061, 0
        %v2063 = vsub.s32 0, %v2061
        %v2064 = vsel %vm2062, %v2063, %v2061
        %v2065 = vclz %v2064
        %v2066 = vsub.s32 %v2065, 2
        %vm2067 = vcmp.gt.s32.totalorder 0, %v2066
        %v2068 = vsel %vm2067, 0, %v2066
        %v2069 = vsub.s32 32, %v2068
        %v2070 = vshll.u32 %v2061, %v2068
        %v2071 = vshrl.u32 %v2053, %v2069
        %v2072 = vor.u32 %v2070, %v2071
        %v2073 = vsub.s32 4294967266, %v2068
        %v2074 = vadd.s32 %v2073, 127
        %v2075 = vshll.u32 %v2074, 23
        %v2076 = vor.u32 4788187, %v2075
        %v2077 = vand.u32 2147483647, %v2076
        %v2079 = vcvt.s32.f32 %v2072
        %v2080 = vmul.f32 %v2079, %v2077
        %v2081 = vxor.u32 %v2080, 2147483648
        %v2082 = vsel %vm1999, %v2081, %v2080
        %v2083 = vsub.s32 4, %v2059
        %v2084 = vsel %vm1999, %v2083, %v2059
        %v2085 = vsel %vm1998, %v436, %v2082
        %v2086 = vsel %vm1998, 0, %v2084
        %v2087 = vcosq.f32.pop %v2085
        %v2088 = vsinq.f32.pop %v2085
        %vm2089 = vweird.f32 %v436
        %v2090 = vadd.s32 %v2086, 3
        %v2091 = vand.u32 %v2090, 3
        %vm2092 = vcmp.lt.s32.totalorder %v2091, 2
        %vm2093 = vcmp.eq.s32.totalorder %v2091, 0
        %v2094 = vxor.u32 %v2088, 2147483648
        %v2095 = vsel %vm2093, %v2087, %v2094
        %vm2096 = vcmp.eq.s32.totalorder %v2091, 2
        %v2097 = vxor.u32 %v2087, 2147483648
        %v2098 = vsel %vm2096, %v2097, %v2088
        %v2099 = vsel %vm2092, %v2095, %v2098
        %v2100 = vsel %vm2089, nan, %v2099
        %2101 = vst [vmem:[%s134] sm:$0xff] %v540
        %2102 = vst [vmem:[%s134 + $0x8] sm:$0xff] %v644
        %2103 = vst [vmem:[%s134 + $0x10] sm:$0xff] %v748
        %2104 = vst [vmem:[%s134 + $0x18] sm:$0xff] %v852
        %2105 = vst [vmem:[%s134 + $0x20] sm:$0xff] %v956
        %2106 = vst [vmem:[%s134 + $0x28] sm:$0xff] %v1060
        %2107 = vst [vmem:[%s134 + $0x30] sm:$0xff] %v1164
        %2108 = vst [vmem:[%s134 + $0x38] sm:$0xff] %v1268
        %2109 = vst [vmem:[%s134 + $0x40] sm:$0xff] %v1372
        %2110 = vst [vmem:[%s134 + $0x48] sm:$0xff] %v1476
        %2111 = vst [vmem:[%s134 + $0x50] sm:$0xff] %v1580
        %2112 = vst [vmem:[%s134 + $0x58] sm:$0xff] %v1684
        %2113 = vst [vmem:[%s134 + $0x60] sm:$0xff] %v1788
        %2114 = vst [vmem:[%s134 + $0x68] sm:$0xff] %v1892
        %2115 = vst [vmem:[%s134 + $0x70] sm:$0xff] %v1996
        %2116 = vst [vmem:[%s134 + $0x78] sm:$0xff] %v2100
        %s2117 = sand.u32 %s71, 1
        %s2118 = scalar_lea.sflag [#allocation3], %s2117
        %s2119 = sand.u32 %s71, 1
        %s2120 = smul.addr %s2119, 128
        %s2121 = scalar_lea.vmem [#allocation2], %s2120
        // Predicated region
        $region29: #{tpu_custom_call.1} parent=27 // pred_check
          %p2122 = pneg %p81
        $region30: #{tpu_custom_call.1} parent=27 // pred_check_branch
          %2124 = sbr.rel (%p2122) target = $region32
        $region31: #{tpu_custom_call.1} parent=27 // pred_region
          %s2126 = ssub.s32 2048, 2048
          %2127 = vsyncadd %s2118, %s2126
          %s2128 = smul.addr %s16, 128
          %s2129 = scalar_lea.hbm %s2, %s2128
          %s2130 = sshll.u32 %s2121, 4
          %s2131 = int_to_ptr.vmem [resolvable:$true] %s2130
          %2136 = dma.vmem_to_hbm [thread:$0]  %s2131, 2048, %s2129, %s2118, 128, 256, 8
        $region32: #{tpu_custom_call.1} parent=27 // pred_fallthru
          _
      $region28: #{tpu_custom_call.1} parent=5 // pred_fallthru
        _
      %p2137 = scmp.le.s32.totalorder 2, %s11
      // Predicated region
      $region33: #{tpu_custom_call.1} parent=5 // pred_check
        %p2138 = pneg %p2137
      $region34: #{tpu_custom_call.1} parent=5 // pred_check_branch
        %2140 = sbr.rel (%p2138) target = $region36
      $region35: #{tpu_custom_call.1} parent=5 // pred_region
        %s2141 = ssub.s32 %s11, 2
        // Predicated region
        $region37: #{tpu_custom_call.1} parent=35 // pred_check
          %p2142 = pneg %p87
        $region38: #{tpu_custom_call.1} parent=35 // pred_check_branch
          %2144 = sbr.rel (%p2142) target = $region40
        $region39: #{tpu_custom_call.1} parent=35 // pred_region
          %s2145 = sand.u32 %s72, 1
          %s2146 = scalar_lea.sflag [#allocation3], %s2145
          %s2147 = sand.u32 %s72, 1
          %s2148 = smul.addr %s2147, 128
          %s2149 = scalar_lea.vmem [#allocation2], %s2148
          %2150 = dma.done %s2146, 2048
        $region40: #{tpu_custom_call.1} parent=35 // pred_fallthru
          _
      $region36: #{tpu_custom_call.1} parent=5 // pred_fallthru
        _
    $region6: #{tpu_custom_call.1} parent=1 // loop_footer
      %s15 = sadd.s32 1, %s11
    $region7: #{tpu_custom_call.1} parent=1 // loop_footer_branch
      %10 = sbr.rel target = $region3
    $region8: #{tpu_custom_call.1} parent=1 // loop_exit
      _
    %2151 = vsyncpa [#allocation3], 1
    %s2152 = scalar_lea.sflag [#allocation3], 1
    %2153 = vsyncpa %s2152, 1

</llo_original>
